<compile_context>
chip_gen: v5e
topology: v5e:2x2
jax: 0.10.0
libtpu: 0.0.40
codegen_flags: <defaults>
</compile_context>

<pallas_src>
import functools

import jax
import jax.numpy as jnp
from jax.experimental import pallas as pl
from jax.experimental.pallas import tpu as pltpu


def _round_up(x, m):
    return (x + m - 1) // m * m


def _detection_kernel(x_ref, w1_ref, b1_ref, w2_ref, b2_ref, oc_ref, os_ref,
                      *, K, Wp, tile_n, single_tile):
    # x_ref:  (Cin, NPT)       zero-padded, flattened image (bf16); lane = flat (h*Wp + w)
    # w1_ref: (K*K, Cout, Cin) conv1 weights (bf16), kk = kh*K + kw
    # b1_ref: (Cout, 1)        conv1 bias (f32)
    # w2_ref: (Cout, 2)        [:, 0] = center 1x1 conv, [:, 1] = scale 1x1 conv (f32)
    # b2_ref: (2,)             SMEM scalars [center_bias, scale_bias] (f32)
    # oc_ref / os_ref: (1, tile_n) lane-dense outputs for this (batch, tile).
    if single_tile:
        base = 0
    else:
        base = pl.multiple_of(pl.program_id(1) * tile_n, 128)

    cout = w1_ref.shape[1]
    acc = jnp.zeros((cout, tile_n), jnp.float32)
    # KxK 'same' conv == K*K shifted matmuls over the flat, spatially padded image.
    for kh in range(K):
        for kw in range(K):
            off = kh * Wp + kw
            xs = x_ref[:, pl.ds(base + off, tile_n)]          # (Cin, tile_n) bf16
            acc = acc + jnp.dot(w1_ref[kh * K + kw], xs,
                                preferred_element_type=jnp.float32)

    feat = jnp.maximum(acc + b1_ref[...], 0.0)                # (Cout, tile_n) f32, ReLU

    # 1x1 convs as lane-dense matvecs (exact f32 on the VPU + sublane reduce).
    center = jnp.sum(feat * w2_ref[:, 0:1], axis=0, keepdims=True) + b2_ref[0]
    scale = jnp.sum(feat * w2_ref[:, 1:2], axis=0, keepdims=True) + b2_ref[1]

    oc_ref[...] = jax.nn.sigmoid(center)                      # pred_center
    os_ref[...] = jnp.log(jnp.maximum(scale, 0.0) + 1e-10)    # pred_scale


def detection_forward(x_nchw, params, *, max_tile_n=1024):
    w1, b1, wc, bc, ws, bs = params
    B, Cin, H, W = x_nchw.shape
    K = w1.shape[0]
    Cout = w1.shape[-1]
    assert K % 2 == 1, "padding='same' path implemented for odd kernel sizes"
    # TODO(synk): even kernel sizes need PyTorch's asymmetric 'same' padding.
    p = K // 2
    Hp, Wp = H + 2 * p, W + 2 * p
    # Output columns per image: H rows of Wp lanes each; the trailing 2p lanes
    # of every row are garbage (computed over padding) and stripped below.
    N = H * Wp
    halo = (K - 1) * (Wp + 1)

    if N <= max_tile_n:
        tile_n, nt = N, 1
    else:
        tile_n = max_tile_n                    # multiple of 128 -> lane-dense stores
        nt = -(-N // tile_n)

    npt = _round_up(max(Hp * Wp, nt * tile_n + halo), 128)

    # Glue: 'same' zero padding, flatten spatial dims to the lane axis,
    # lane-align, cast activations/weights to bf16 (f32 accumulation in-kernel).
    xp = jnp.pad(x_nchw.astype(jnp.float32), ((0, 0), (0, 0), (p, p), (p, p)))
    xf = xp.reshape(B, Cin, Hp * Wp)
    xf = jnp.pad(xf, ((0, 0), (0, 0), (0, npt - Hp * Wp))).astype(jnp.bfloat16)

    w1t = jnp.transpose(w1, (0, 1, 3, 2)).reshape(K * K, Cout, Cin)
    w1t = w1t.astype(jnp.bfloat16)
    b1c = b1.reshape(Cout, 1).astype(jnp.float32)
    w2 = jnp.stack([wc, ws], axis=1).astype(jnp.float32)      # (Cout, 2)
    b2 = jnp.stack([bc, bs]).astype(jnp.float32)              # (2,)

    kernel = functools.partial(_detection_kernel, K=K, Wp=Wp, tile_n=tile_n,
                               single_tile=(nt == 1))

    out_c, out_s = pl.pallas_call(
        kernel,
        out_shape=(jax.ShapeDtypeStruct((B, 1, N), jnp.float32),
                   jax.ShapeDtypeStruct((B, 1, N), jnp.float32)),
        grid=(B, nt),
        in_specs=[
            # Full padded image row per batch element; block index constant in t,
            # so it is DMA'd once per batch element and stays VMEM-resident.
            pl.BlockSpec((None, Cin, npt), lambda b, t: (b, 0, 0)),
            pl.BlockSpec((K * K, Cout, Cin), lambda b, t: (0, 0, 0)),
            pl.BlockSpec((Cout, 1), lambda b, t: (0, 0)),
            pl.BlockSpec((Cout, 2), lambda b, t: (0, 0)),
            pl.BlockSpec(memory_space=pltpu.MemorySpace.SMEM),
        ],
        out_specs=(
            pl.BlockSpec((None, 1, tile_n), lambda b, t: (b, 0, t)),
            pl.BlockSpec((None, 1, tile_n), lambda b, t: (b, 0, t)),
        ),
        compiler_params=pltpu.CompilerParams(
            dimension_semantics=("parallel", "parallel")),
    )(xf, w1t, b1c, w2, b2)

    pred_center = out_c.reshape(B, 1, H, Wp)[..., :W]
    pred_scale = out_s.reshape(B, 1, H, Wp)[..., :W]
    return [pred_center, pred_scale]


def init_params(key, Cin, Cout, K):
    # Deterministic synthetic init mirroring nn.Conv2d's uniform(-1/sqrt(fan_in), ...)
    k1, k2, k3, k4, k5, k6 = jax.random.split(key, 6)
    bnd1 = 1.0 / (Cin * K * K) ** 0.5
    w1 = jax.random.uniform(k1, (K, K, Cin, Cout), jnp.float32, -bnd1, bnd1)
    b1 = jax.random.uniform(k2, (Cout,), jnp.float32, -bnd1, bnd1)
    bnd2 = 1.0 / Cout ** 0.5
    wc = jax.random.uniform(k3, (Cout,), jnp.float32, -bnd2, bnd2)
    bc = jax.random.uniform(k4, (), jnp.float32, -bnd2, bnd2)
    ws = jax.random.uniform(k5, (Cout,), jnp.float32, -bnd2, bnd2)
    bs = jax.random.uniform(k6, (), jnp.float32, -bnd2, bnd2)
    return (w1, b1, wc, bc, ws, bs)


def reference_forward(x_nchw, params):
    # Plain-JAX (XLA) reference. Inputs/weights of the first conv are rounded
    # to bf16 to match the kernel's deliberate bf16 activation/weight cast
    # (accumulation stays f32 in both).
    w1, b1, wc, bc, ws, bs = params
    xb = x_nchw.astype(jnp.bfloat16).astype(jnp.float32)
    w1b = w1.astype(jnp.bfloat16).astype(jnp.float32)
    w1_oihw = jnp.transpose(w1b, (3, 2, 0, 1))
    y = jax.lax.conv_general_dilated(
        xb, w1_oihw, window_strides=(1, 1), padding='SAME',
        dimension_numbers=('NCHW', 'OIHW', 'NCHW'),
        precision=jax.lax.Precision.HIGHEST)
    y = jnp.maximum(y + b1.reshape(1, -1, 1, 1), 0.0)
    center = jnp.einsum('bchw,c->bhw', y, wc,
                        precision=jax.lax.Precision.HIGHEST)[:, None] + bc
    scale = jnp.einsum('bchw,c->bhw', y, ws,
                       precision=jax.lax.Precision.HIGHEST)[:, None] + bs
    return jax.nn.sigmoid(center), jnp.log(jnp.maximum(scale, 0.0) + 1e-10)


if __name__ == "__main__":
    B, Cin, H, W = 2, 4, 16, 16
    Cout, K = 32, 3

    key = jax.random.PRNGKey(0)
    kx, kp = jax.random.split(key)
    x = jax.random.normal(kx, (B, Cin, H, W), jnp.float32)
    params = init_params(kp, Cin, Cout, K)

    fwd = jax.jit(detection_forward)
    pred_center, pred_scale = fwd(x, params)
    jax.block_until_ready(pred_center)
    jax.block_until_ready(pred_scale)

    assert pred_center.shape == (B, 1, H, W) and pred_scale.shape == (B, 1, H, W)

    ref_center, ref_scale = reference_forward(x, params)
    assert jnp.allclose(pred_center, ref_center, atol=5e-3, rtol=5e-3), \
        "pred_center mismatch vs reference"
    # Only compare log-scale where the pre-activation is safely away from zero
    # (log amplifies tiny precision differences near the relu boundary).
    mask = ref_scale > -8.0
    assert jnp.allclose(jnp.where(mask, pred_scale, 0.0),
                        jnp.where(mask, ref_scale, 0.0), atol=5e-2), \
        "pred_scale mismatch vs reference"

    print("KERNEL_OK")
</pallas_src>

<mosaic_0001>
module attributes {stable_mosaic.version = 11 : i64} {
  func.func @_detection_kernel(%arg0: i32, %arg1: i32, %arg2: memref<1x4x384xbf16, #tpu.memory_space<vmem>>, %arg3: memref<9x32x4xbf16, #tpu.memory_space<vmem>>, %arg4: memref<32x1xf32, #tpu.memory_space<vmem>>, %arg5: memref<32x2xf32, #tpu.memory_space<vmem>>, %arg6: memref<2xf32, #tpu.memory_space<smem>>, %arg7: memref<1x1x288xf32, #tpu.memory_space<vmem>>, %arg8: memref<1x1x288xf32, #tpu.memory_space<vmem>>) attributes {dimension_semantics = [#tpu.dimension_semantics<parallel>, #tpu.dimension_semantics<parallel>], iteration_bounds = array<i64: 2, 1>, scalar_prefetch = 0 : i64, scratch_operands = 0 : i64, tpu.core_type = #tpu.core_type<tc>, window_params = [{transform_indices = @transform_0, window_bounds = array<i64: 1, 4, 384>}, {pipeline_mode = #tpu.pipeline_mode<synchronous>, transform_indices = @transform_1, window_bounds = array<i64: 9, 32, 4>}, {pipeline_mode = #tpu.pipeline_mode<synchronous>, transform_indices = @transform_2, window_bounds = array<i64: 32, 1>}, {pipeline_mode = #tpu.pipeline_mode<synchronous>, transform_indices = @transform_3, window_bounds = array<i64: 32, 2>}, {transform_indices = @transform_4, window_bounds = array<i64: 2>}, {transform_indices = @transform_5, window_bounds = array<i64: 1, 1, 288>}, {transform_indices = @transform_6, window_bounds = array<i64: 1, 1, 288>}]} {
    %cst = arith.constant 0.000000e+00 : f32
    %0 = vector.broadcast %cst : f32 to vector<32x288xf32>
    %c0 = arith.constant 0 : index
    %c0_0 = arith.constant 0 : index
    %c0_1 = arith.constant 0 : index
    %1 = vector.load %arg2[%c0, %c0_0, %c0_1] : memref<1x4x384xbf16, #tpu.memory_space<vmem>>, vector<1x4x288xbf16>
    %2 = vector.shape_cast %1 : vector<1x4x288xbf16> to vector<4x288xbf16>
    %c0_2 = arith.constant 0 : index
    %c0_3 = arith.constant 0 : index
    %c0_4 = arith.constant 0 : index
    %3 = vector.load %arg3[%c0_2, %c0_3, %c0_4] : memref<9x32x4xbf16, #tpu.memory_space<vmem>>, vector<1x32x4xbf16>
    %4 = vector.shape_cast %3 : vector<1x32x4xbf16> to vector<32x4xbf16>
    %cst_5 = arith.constant dense<0.000000e+00> : vector<32x288xf32>
    %5 = tpu.matmul %4, %2, %cst_5 {dimension_numbers = #tpu.dot_dimension_numbers<[1], [0], [0], [1], [0, 0, 1, 1], [], []>} : vector<32x4xbf16>, vector<4x288xbf16>, vector<32x288xf32> -> vector<32x288xf32>
    %6 = arith.addf %0, %5 : vector<32x288xf32>
    %c0_6 = arith.constant 0 : index
    %c0_7 = arith.constant 0 : index
    %c1 = arith.constant 1 : index
    %7 = vector.load %arg2[%c0_6, %c0_7, %c1] : memref<1x4x384xbf16, #tpu.memory_space<vmem>>, vector<1x4x288xbf16>
    %8 = vector.shape_cast %7 : vector<1x4x288xbf16> to vector<4x288xbf16>
    %c1_8 = arith.constant 1 : index
    %c0_9 = arith.constant 0 : index
    %c0_10 = arith.constant 0 : index
    %9 = vector.load %arg3[%c1_8, %c0_9, %c0_10] : memref<9x32x4xbf16, #tpu.memory_space<vmem>>, vector<1x32x4xbf16>
    %10 = vector.shape_cast %9 : vector<1x32x4xbf16> to vector<32x4xbf16>
    %cst_11 = arith.constant dense<0.000000e+00> : vector<32x288xf32>
    %11 = tpu.matmul %10, %8, %cst_11 {dimension_numbers = #tpu.dot_dimension_numbers<[1], [0], [0], [1], [0, 0, 1, 1], [], []>} : vector<32x4xbf16>, vector<4x288xbf16>, vector<32x288xf32> -> vector<32x288xf32>
    %12 = arith.addf %6, %11 : vector<32x288xf32>
    %c0_12 = arith.constant 0 : index
    %c0_13 = arith.constant 0 : index
    %c2 = arith.constant 2 : index
    %13 = vector.load %arg2[%c0_12, %c0_13, %c2] : memref<1x4x384xbf16, #tpu.memory_space<vmem>>, vector<1x4x288xbf16>
    %14 = vector.shape_cast %13 : vector<1x4x288xbf16> to vector<4x288xbf16>
    %c2_14 = arith.constant 2 : index
    %c0_15 = arith.constant 0 : index
    %c0_16 = arith.constant 0 : index
    %15 = vector.load %arg3[%c2_14, %c0_15, %c0_16] : memref<9x32x4xbf16, #tpu.memory_space<vmem>>, vector<1x32x4xbf16>
    %16 = vector.shape_cast %15 : vector<1x32x4xbf16> to vector<32x4xbf16>
    %cst_17 = arith.constant dense<0.000000e+00> : vector<32x288xf32>
    %17 = tpu.matmul %16, %14, %cst_17 {dimension_numbers = #tpu.dot_dimension_numbers<[1], [0], [0], [1], [0, 0, 1, 1], [], []>} : vector<32x4xbf16>, vector<4x288xbf16>, vector<32x288xf32> -> vector<32x288xf32>
    %18 = arith.addf %12, %17 : vector<32x288xf32>
    %c0_18 = arith.constant 0 : index
    %c0_19 = arith.constant 0 : index
    %c18 = arith.constant 18 : index
    %19 = vector.load %arg2[%c0_18, %c0_19, %c18] : memref<1x4x384xbf16, #tpu.memory_space<vmem>>, vector<1x4x288xbf16>
    %20 = vector.shape_cast %19 : vector<1x4x288xbf16> to vector<4x288xbf16>
    %c3 = arith.constant 3 : index
    %c0_20 = arith.constant 0 : index
    %c0_21 = arith.constant 0 : index
    %21 = vector.load %arg3[%c3, %c0_20, %c0_21] : memref<9x32x4xbf16, #tpu.memory_space<vmem>>, vector<1x32x4xbf16>
    %22 = vector.shape_cast %21 : vector<1x32x4xbf16> to vector<32x4xbf16>
    %cst_22 = arith.constant dense<0.000000e+00> : vector<32x288xf32>
    %23 = tpu.matmul %22, %20, %cst_22 {dimension_numbers = #tpu.dot_dimension_numbers<[1], [0], [0], [1], [0, 0, 1, 1], [], []>} : vector<32x4xbf16>, vector<4x288xbf16>, vector<32x288xf32> -> vector<32x288xf32>
    %24 = arith.addf %18, %23 : vector<32x288xf32>
    %c0_23 = arith.constant 0 : index
    %c0_24 = arith.constant 0 : index
    %c19 = arith.constant 19 : index
    %25 = vector.load %arg2[%c0_23, %c0_24, %c19] : memref<1x4x384xbf16, #tpu.memory_space<vmem>>, vector<1x4x288xbf16>
    %26 = vector.shape_cast %25 : vector<1x4x288xbf16> to vector<4x288xbf16>
    %c4 = arith.constant 4 : index
    %c0_25 = arith.constant 0 : index
    %c0_26 = arith.constant 0 : index
    %27 = vector.load %arg3[%c4, %c0_25, %c0_26] : memref<9x32x4xbf16, #tpu.memory_space<vmem>>, vector<1x32x4xbf16>
    %28 = vector.shape_cast %27 : vector<1x32x4xbf16> to vector<32x4xbf16>
    %cst_27 = arith.constant dense<0.000000e+00> : vector<32x288xf32>
    %29 = tpu.matmul %28, %26, %cst_27 {dimension_numbers = #tpu.dot_dimension_numbers<[1], [0], [0], [1], [0, 0, 1, 1], [], []>} : vector<32x4xbf16>, vector<4x288xbf16>, vector<32x288xf32> -> vector<32x288xf32>
    %30 = arith.addf %24, %29 : vector<32x288xf32>
    %c0_28 = arith.constant 0 : index
    %c0_29 = arith.constant 0 : index
    %c20 = arith.constant 20 : index
    %31 = vector.load %arg2[%c0_28, %c0_29, %c20] : memref<1x4x384xbf16, #tpu.memory_space<vmem>>, vector<1x4x288xbf16>
    %32 = vector.shape_cast %31 : vector<1x4x288xbf16> to vector<4x288xbf16>
    %c5 = arith.constant 5 : index
    %c0_30 = arith.constant 0 : index
    %c0_31 = arith.constant 0 : index
    %33 = vector.load %arg3[%c5, %c0_30, %c0_31] : memref<9x32x4xbf16, #tpu.memory_space<vmem>>, vector<1x32x4xbf16>
    %34 = vector.shape_cast %33 : vector<1x32x4xbf16> to vector<32x4xbf16>
    %cst_32 = arith.constant dense<0.000000e+00> : vector<32x288xf32>
    %35 = tpu.matmul %34, %32, %cst_32 {dimension_numbers = #tpu.dot_dimension_numbers<[1], [0], [0], [1], [0, 0, 1, 1], [], []>} : vector<32x4xbf16>, vector<4x288xbf16>, vector<32x288xf32> -> vector<32x288xf32>
    %36 = arith.addf %30, %35 : vector<32x288xf32>
    %c0_33 = arith.constant 0 : index
    %c0_34 = arith.constant 0 : index
    %c36 = arith.constant 36 : index
    %37 = vector.load %arg2[%c0_33, %c0_34, %c36] : memref<1x4x384xbf16, #tpu.memory_space<vmem>>, vector<1x4x288xbf16>
    %38 = vector.shape_cast %37 : vector<1x4x288xbf16> to vector<4x288xbf16>
    %c6 = arith.constant 6 : index
    %c0_35 = arith.constant 0 : index
    %c0_36 = arith.constant 0 : index
    %39 = vector.load %arg3[%c6, %c0_35, %c0_36] : memref<9x32x4xbf16, #tpu.memory_space<vmem>>, vector<1x32x4xbf16>
    %40 = vector.shape_cast %39 : vector<1x32x4xbf16> to vector<32x4xbf16>
    %cst_37 = arith.constant dense<0.000000e+00> : vector<32x288xf32>
    %41 = tpu.matmul %40, %38, %cst_37 {dimension_numbers = #tpu.dot_dimension_numbers<[1], [0], [0], [1], [0, 0, 1, 1], [], []>} : vector<32x4xbf16>, vector<4x288xbf16>, vector<32x288xf32> -> vector<32x288xf32>
    %42 = arith.addf %36, %41 : vector<32x288xf32>
    %c0_38 = arith.constant 0 : index
    %c0_39 = arith.constant 0 : index
    %c37 = arith.constant 37 : index
    %43 = vector.load %arg2[%c0_38, %c0_39, %c37] : memref<1x4x384xbf16, #tpu.memory_space<vmem>>, vector<1x4x288xbf16>
    %44 = vector.shape_cast %43 : vector<1x4x288xbf16> to vector<4x288xbf16>
    %c7 = arith.constant 7 : index
    %c0_40 = arith.constant 0 : index
    %c0_41 = arith.constant 0 : index
    %45 = vector.load %arg3[%c7, %c0_40, %c0_41] : memref<9x32x4xbf16, #tpu.memory_space<vmem>>, vector<1x32x4xbf16>
    %46 = vector.shape_cast %45 : vector<1x32x4xbf16> to vector<32x4xbf16>
    %cst_42 = arith.constant dense<0.000000e+00> : vector<32x288xf32>
    %47 = tpu.matmul %46, %44, %cst_42 {dimension_numbers = #tpu.dot_dimension_numbers<[1], [0], [0], [1], [0, 0, 1, 1], [], []>} : vector<32x4xbf16>, vector<4x288xbf16>, vector<32x288xf32> -> vector<32x288xf32>
    %48 = arith.addf %42, %47 : vector<32x288xf32>
    %c0_43 = arith.constant 0 : index
    %c0_44 = arith.constant 0 : index
    %c38 = arith.constant 38 : index
    %49 = vector.load %arg2[%c0_43, %c0_44, %c38] : memref<1x4x384xbf16, #tpu.memory_space<vmem>>, vector<1x4x288xbf16>
    %50 = vector.shape_cast %49 : vector<1x4x288xbf16> to vector<4x288xbf16>
    %c8 = arith.constant 8 : index
    %c0_45 = arith.constant 0 : index
    %c0_46 = arith.constant 0 : index
    %51 = vector.load %arg3[%c8, %c0_45, %c0_46] : memref<9x32x4xbf16, #tpu.memory_space<vmem>>, vector<1x32x4xbf16>
    %52 = vector.shape_cast %51 : vector<1x32x4xbf16> to vector<32x4xbf16>
    %cst_47 = arith.constant dense<0.000000e+00> : vector<32x288xf32>
    %53 = tpu.matmul %52, %50, %cst_47 {dimension_numbers = #tpu.dot_dimension_numbers<[1], [0], [0], [1], [0, 0, 1, 1], [], []>} : vector<32x4xbf16>, vector<4x288xbf16>, vector<32x288xf32> -> vector<32x288xf32>
    %54 = arith.addf %48, %53 : vector<32x288xf32>
    %c0_48 = arith.constant 0 : index
    %c0_49 = arith.constant 0 : index
    %55 = vector.load %arg4[%c0_48, %c0_49] : memref<32x1xf32, #tpu.memory_space<vmem>>, vector<32x1xf32>
    %56 = vector.broadcast %55 : vector<32x1xf32> to vector<32x288xf32>
    %57 = arith.addf %54, %56 : vector<32x288xf32>
    %cst_50 = arith.constant 0.000000e+00 : f32
    %58 = vector.broadcast %cst_50 : f32 to vector<32x288xf32>
    %59 = arith.maximumf %57, %58 : vector<32x288xf32>
    %c0_51 = arith.constant 0 : index
    %c0_52 = arith.constant 0 : index
    %60 = vector.load %arg5[%c0_51, %c0_52] : memref<32x2xf32, #tpu.memory_space<vmem>>, vector<32x1xf32>
    %61 = vector.broadcast %60 : vector<32x1xf32> to vector<32x288xf32>
    %62 = arith.mulf %59, %61 : vector<32x288xf32>
    %cst_53 = arith.constant dense<0.000000e+00> : vector<288xf32>
    %63 = vector.multi_reduction <add>, %62, %cst_53 [0] : vector<32x288xf32> to vector<288xf32>
    %64 = vector.shape_cast %63 : vector<288xf32> to vector<1x288xf32>
    %c0_54 = arith.constant 0 : index
    %65 = memref.load %arg6[%c0_54] : memref<2xf32, #tpu.memory_space<smem>>
    %66 = vector.broadcast %65 : f32 to vector<1x288xf32>
    %67 = arith.addf %64, %66 : vector<1x288xf32>
    %c0_55 = arith.constant 0 : index
    %c1_56 = arith.constant 1 : index
    %68 = vector.load %arg5[%c0_55, %c1_56] : memref<32x2xf32, #tpu.memory_space<vmem>>, vector<32x1xf32>
    %69 = vector.broadcast %68 : vector<32x1xf32> to vector<32x288xf32>
    %70 = arith.mulf %59, %69 : vector<32x288xf32>
    %cst_57 = arith.constant dense<0.000000e+00> : vector<288xf32>
    %71 = vector.multi_reduction <add>, %70, %cst_57 [0] : vector<32x288xf32> to vector<288xf32>
    %72 = vector.shape_cast %71 : vector<288xf32> to vector<1x288xf32>
    %c1_58 = arith.constant 1 : index
    %73 = memref.load %arg6[%c1_58] : memref<2xf32, #tpu.memory_space<smem>>
    %74 = vector.broadcast %73 : f32 to vector<1x288xf32>
    %75 = arith.addf %72, %74 : vector<1x288xf32>
    %76 = arith.negf %67 : vector<1x288xf32>
    %77 = math.exp %76 : vector<1x288xf32>
    %cst_59 = arith.constant 1.000000e+00 : f32
    %78 = vector.broadcast %cst_59 : f32 to vector<1x288xf32>
    %79 = arith.addf %78, %77 : vector<1x288xf32>
    %80 = arith.divf %78, %79 : vector<1x288xf32>
    %c0_60 = arith.constant 0 : index
    %c0_61 = arith.constant 0 : index
    %c0_62 = arith.constant 0 : index
    %81 = vector.load %arg7[%c0_60, %c0_61, %c0_62] : memref<1x1x288xf32, #tpu.memory_space<vmem>>, vector<1x1x288xf32>
    %82 = vector.shape_cast %81 : vector<1x1x288xf32> to vector<1x288xf32>
    %83 = vector.shape_cast %80 : vector<1x288xf32> to vector<1x1x288xf32>
    tpu.vector_store %arg7[%c0_60, %c0_61, %c0_62], %83 {strides = array<i32>} : memref<1x1x288xf32, #tpu.memory_space<vmem>>, vector<1x1x288xf32>,
    %cst_63 = arith.constant 0.000000e+00 : f32
    %84 = vector.broadcast %cst_63 : f32 to vector<1x288xf32>
    %85 = arith.maximumf %75, %84 : vector<1x288xf32>
    %cst_64 = arith.constant 1.000000e-10 : f32
    %86 = vector.broadcast %cst_64 : f32 to vector<1x288xf32>
    %87 = arith.addf %85, %86 : vector<1x288xf32>
    %88 = math.log %87 : vector<1x288xf32>
    %c0_65 = arith.constant 0 : index
    %c0_66 = arith.constant 0 : index
    %c0_67 = arith.constant 0 : index
    %89 = vector.load %arg8[%c0_65, %c0_66, %c0_67] : memref<1x1x288xf32, #tpu.memory_space<vmem>>, vector<1x1x288xf32>
    %90 = vector.shape_cast %89 : vector<1x1x288xf32> to vector<1x288xf32>
    %91 = vector.shape_cast %88 : vector<1x288xf32> to vector<1x1x288xf32>
    tpu.vector_store %arg8[%c0_65, %c0_66, %c0_67], %91 {strides = array<i32>} : memref<1x1x288xf32, #tpu.memory_space<vmem>>, vector<1x1x288xf32>,
    return
  }
  func.func @transform_0(%arg0: i32, %arg1: i32) -> (i32, i32, i32) {
    %c0_i32 = arith.constant 0 : i32
    %c0_i32_0 = arith.constant 0 : i32
    %c0_i32_1 = arith.constant 0 : i32
    return %arg0, %c0_i32, %c0_i32_0 : i32, i32, i32
  }
  func.func @transform_1(%arg0: i32, %arg1: i32) -> (i32, i32, i32) {
    %c0_i32 = arith.constant 0 : i32
    %c0_i32_0 = arith.constant 0 : i32
    %c0_i32_1 = arith.constant 0 : i32
    %c0_i32_2 = arith.constant 0 : i32
    return %c0_i32, %c0_i32_0, %c0_i32_1 : i32, i32, i32
  }
  func.func @transform_2(%arg0: i32, %arg1: i32) -> (i32, i32) {
    %c0_i32 = arith.constant 0 : i32
    %c0_i32_0 = arith.constant 0 : i32
    %c0_i32_1 = arith.constant 0 : i32
    return %c0_i32, %c0_i32_0 : i32, i32
  }
  func.func @transform_3(%arg0: i32, %arg1: i32) -> (i32, i32) {
    %c0_i32 = arith.constant 0 : i32
    %c0_i32_0 = arith.constant 0 : i32
    %c0_i32_1 = arith.constant 0 : i32
    return %c0_i32, %c0_i32_0 : i32, i32
  }
  func.func @transform_4(%arg0: i32, %arg1: i32) -> i32 {
    %c0_i32 = arith.constant 0 : i32
    %c0_i32_0 = arith.constant 0 : i32
    return %c0_i32 : i32
  }
  func.func @transform_5(%arg0: i32, %arg1: i32) -> (i32, i32, i32) {
    %c0_i32 = arith.constant 0 : i32
    %c0_i32_0 = arith.constant 0 : i32
    return %arg0, %c0_i32, %arg1 : i32, i32, i32
  }
  func.func @transform_6(%arg0: i32, %arg1: i32) -> (i32, i32, i32) {
    %c0_i32 = arith.constant 0 : i32
    %c0_i32_0 = arith.constant 0 : i32
    return %arg0, %c0_i32, %arg1 : i32, i32, i32
  }
}

</mosaic_0001>

<llo_original>
// kernel: detection_forward.1
$region0: #{detection_forward.1}
  #allocation0 [shape = 'u32[]', space=smem, size = 0x4, offset = 0x4, fixed_abs, tag = 'smem constant byte address 0x4 - core index']
  #allocation1 [shape = 'u32[72,128]{1,0:T(1,128)}', space=vmem, size = 0x9000, scoped, tag = 'internal scratch']
  %s0 = inlined_call_operand.vmem [shape: bf16[2,4,384], index: 0, kind: input, shape index: {}]
  %s1 = inlined_call_operand.vmem [shape: bf16[9,32,4], index: 1, kind: input, shape index: {}]
  %s2 = inlined_call_operand.vmem [shape: f32[32,1], index: 2, kind: input, shape index: {}]
  %s3 = inlined_call_operand.vmem [shape: f32[32,2], index: 3, kind: input, shape index: {}]
  %s4 = inlined_call_operand.vmem [shape: f32[2], index: 4, kind: input, shape index: {}]
  %s5 = inlined_call_operand.vmem [shape: f32[2,1,288], index: 5, kind: output, shape index: {0}]
  %s6 = inlined_call_operand.vmem [shape: f32[2,1,288], index: 6, kind: output, shape index: {1}]
  %7 = xla_tuple %s5, %s6
  %s8 = sld [smem:[#allocation0]]
  $region65: #{detection_forward.1} parent=0
    _
  %s10 = ssub.s32 1, %s8
  %s11 = scalar_select 0, %s10, %s8
  $region1: #{detection_forward.1} parent=0
    #allocation2 [shape = 'u8[512]{0}', space=smem, size = 0x200, scoped, tag = 'input window, operand 4, single buffered']
    #allocation3 [shape = 's32[2]{0}', space=sflag, size = 0x8, scoped, tag = 'scoped memory for detection_forward.1']
    %12 = vsyncpa [#allocation3], 0
    loop: start=0, step=1, limit=4
    $region2: #{detection_forward.1} parent=1 // loop_pre_header
      _
    $region3: #{detection_forward.1} parent=1 // loop_header
      %s14 = sphi 0, %s18
      %p15 = scmp.ge.s32.totalorder %s14, 4
      %s21 = sphi 0, %s33
      %s22 = sphi 0, %s29
      %s23 = sphi 0, %s21
      %s24 = sphi 0, %s22
      %s25 = sphi 0, %s23
      %s26 = sphi 0, %s24
      %s36 = sphi 0, %s38
      %s39 = sphi 0, %s36
      %s40 = sphi 0, %s39
      %s56 = sphi 0, %s40
      %s60 = sphi 0, %s60
      %s62 = sphi 0, %s60
      %s63 = sphi 0, %s62
      %s77 = sphi 0, %s63
      %s81 = sphi 0, %s81
      %s83 = sphi 0, %s81
      %s84 = sphi 0, %s83
      %s98 = sphi 0, %s84
      %s102 = sphi 0, %s102
      %s104 = sphi 0, %s102
      %s105 = sphi 0, %s104
      %s119 = sphi 0, %s105
      %s123 = sphi 0, %s123
      %s125 = sphi 0, %s123
      %s126 = sphi 0, %s125
      %s140 = sphi 0, %s126
      %s148 = sphi 0, %s150
      %s151 = sphi 0, %s148
      %s152 = sphi 0, %s151
      %s168 = sphi 0, %s152
      %s176 = sphi 0, %s178
      %s179 = sphi 0, %s176
      %s180 = sphi 0, %s179
      %s196 = sphi 0, %s180
    $region4: #{detection_forward.1} parent=1 // loop_header_branch
      %17 = sbr.rel (%p15) target = $region8
    $region5: #{detection_forward.1} parent=1 // loop_body
      %s19 = ssub.s32 %s14, 1
      %s20 = ssub.s32 %s14, 2
      %s27 = sadd.s32 1, %s22
      %p28 = scmp.ge.s32.totalorder %s27, 1
      %s29 = scalar_select %p28, 0, %s27
      %s30 = sadd.s32 1, %s21
      %s31 = scalar_select %p28, %s30, %s21
      %p32 = scmp.ge.s32.totalorder %s31, 2
      %s33 = scalar_select %p32, 0, %s31
      %s34 = ssub.s32 %s21, %s33
      %p35 = scmp.eq.s32.totalorder %s34, 0
      %s37 = sadd.s32 %s36, 1
      %s38 = scalar_select %p35, %s36, %s37
      %p41 = pneg %p35
      %p42 = scmp.eq.s32.totalorder %s14, 1
      %p43 = por %p41, %p42
      %p44 = scmp.ne.s32.totalorder %s36, %s39
      %p45 = scmp.eq.s32.totalorder %s14, 0
      %p46 = por %p44, %p45
      %p47 = scmp.ne.s32.totalorder %s36, %s39
      %p48 = scmp.eq.s32.totalorder %s19, 1
      %p49 = por %p47, %p48
      %p50 = scmp.ne.s32.totalorder %s39, %s40
      %p51 = scmp.eq.s32.totalorder %s19, 0
      %p52 = por %p50, %p51
      %p53 = scmp.ne.s32.totalorder %s39, %s40
      %p54 = scmp.eq.s32.totalorder %s20, 1
      %p55 = por %p53, %p54
      %p57 = scmp.ne.s32.totalorder %s40, %s56
      %p58 = scmp.eq.s32.totalorder %s20, 0
      %p59 = por %p57, %p58
      %s61 = sadd.s32 %s60, 1
      %p64 = scmp.eq.s32.totalorder %s14, 1
      %p65 = scmp.ne.s32.totalorder %s60, %s62
      %p66 = scmp.eq.s32.totalorder %s14, 0
      %p67 = por %p65, %p66
      %p68 = scmp.ne.s32.totalorder %s60, %s62
      %p69 = scmp.eq.s32.totalorder %s19, 1
      %p70 = por %p68, %p69
      %p71 = scmp.ne.s32.totalorder %s62, %s63
      %p72 = scmp.eq.s32.totalorder %s19, 0
      %p73 = por %p71, %p72
      %p74 = scmp.ne.s32.totalorder %s62, %s63
      %p75 = scmp.eq.s32.totalorder %s20, 1
      %p76 = por %p74, %p75
      %p78 = scmp.ne.s32.totalorder %s63, %s77
      %p79 = scmp.eq.s32.totalorder %s20, 0
      %p80 = por %p78, %p79
      %s82 = sadd.s32 %s81, 1
      %p85 = scmp.eq.s32.totalorder %s14, 1
      %p86 = scmp.ne.s32.totalorder %s81, %s83
      %p87 = scmp.eq.s32.totalorder %s14, 0
      %p88 = por %p86, %p87
      %p89 = scmp.ne.s32.totalorder %s81, %s83
      %p90 = scmp.eq.s32.totalorder %s19, 1
      %p91 = por %p89, %p90
      %p92 = scmp.ne.s32.totalorder %s83, %s84
      %p93 = scmp.eq.s32.totalorder %s19, 0
      %p94 = por %p92, %p93
      %p95 = scmp.ne.s32.totalorder %s83, %s84
      %p96 = scmp.eq.s32.totalorder %s20, 1
      %p97 = por %p95, %p96
      %p99 = scmp.ne.s32.totalorder %s84, %s98
      %p100 = scmp.eq.s32.totalorder %s20, 0
      %p101 = por %p99, %p100
      %s103 = sadd.s32 %s102, 1
      %p106 = scmp.eq.s32.totalorder %s14, 1
      %p107 = scmp.ne.s32.totalorder %s102, %s104
      %p108 = scmp.eq.s32.totalorder %s14, 0
      %p109 = por %p107, %p108
      %p110 = scmp.ne.s32.totalorder %s102, %s104
      %p111 = scmp.eq.s32.totalorder %s19, 1
      %p112 = por %p110, %p111
      %p113 = scmp.ne.s32.totalorder %s104, %s105
      %p114 = scmp.eq.s32.totalorder %s19, 0
      %p115 = por %p113, %p114
      %p116 = scmp.ne.s32.totalorder %s104, %s105
      %p117 = scmp.eq.s32.totalorder %s20, 1
      %p118 = por %p116, %p117
      %p120 = scmp.ne.s32.totalorder %s105, %s119
      %p121 = scmp.eq.s32.totalorder %s20, 0
      %p122 = por %p120, %p121
      %s124 = sadd.s32 %s123, 1
      %p127 = scmp.eq.s32.totalorder %s14, 1
      %p128 = scmp.ne.s32.totalorder %s123, %s125
      %p129 = scmp.eq.s32.totalorder %s14, 0
      %p130 = por %p128, %p129
      %p131 = scmp.ne.s32.totalorder %s123, %s125
      %p132 = scmp.eq.s32.totalorder %s19, 1
      %p133 = por %p131, %p132
      %p134 = scmp.ne.s32.totalorder %s125, %s126
      %p135 = scmp.eq.s32.totalorder %s19, 0
      %p136 = por %p134, %p135
      %p137 = scmp.ne.s32.totalorder %s125, %s126
      %p138 = scmp.eq.s32.totalorder %s20, 1
      %p139 = por %p137, %p138
      %p141 = scmp.ne.s32.totalorder %s126, %s140
      %p142 = scmp.eq.s32.totalorder %s20, 0
      %p143 = por %p141, %p142
      %s144 = ssub.s32 %s21, %s33
      %s145 = ssub.s32 %s22, %s29
      %s146 = sor.u32 %s144, %s145
      %p147 = scmp.eq.s32.totalorder %s146, 0
      %s149 = sadd.s32 %s148, 1
      %s150 = scalar_select %p147, %s148, %s149
      %p153 = pneg %p147
      %p154 = scmp.eq.s32.totalorder %s14, 1
      %p155 = por %p153, %p154
      %p156 = scmp.ne.s32.totalorder %s148, %s151
      %p157 = scmp.eq.s32.totalorder %s14, 0
      %p158 = por %p156, %p157
      %p159 = scmp.ne.s32.totalorder %s148, %s151
      %p160 = scmp.eq.s32.totalorder %s19, 1
      %p161 = por %p159, %p160
      %p162 = scmp.ne.s32.totalorder %s151, %s152
      %p163 = scmp.eq.s32.totalorder %s19, 0
      %p164 = por %p162, %p163
      %p165 = scmp.ne.s32.totalorder %s151, %s152
      %p166 = scmp.eq.s32.totalorder %s20, 1
      %p167 = por %p165, %p166
      %p169 = scmp.ne.s32.totalorder %s152, %s168
      %p170 = scmp.eq.s32.totalorder %s20, 0
      %p171 = por %p169, %p170
      %s172 = ssub.s32 %s21, %s33
      %s173 = ssub.s32 %s22, %s29
      %s174 = sor.u32 %s172, %s173
      %p175 = scmp.eq.s32.totalorder %s174, 0
      %s177 = sadd.s32 %s176, 1
      %s178 = scalar_select %p175, %s176, %s177
      %p181 = pneg %p175
      %p182 = scmp.eq.s32.totalorder %s14, 1
      %p183 = por %p181, %p182
      %p184 = scmp.ne.s32.totalorder %s176, %s179
      %p185 = scmp.eq.s32.totalorder %s14, 0
      %p186 = por %p184, %p185
      %p187 = scmp.ne.s32.totalorder %s176, %s179
      %p188 = scmp.eq.s32.totalorder %s19, 1
      %p189 = por %p187, %p188
      %p190 = scmp.ne.s32.totalorder %s179, %s180
      %p191 = scmp.eq.s32.totalorder %s19, 0
      %p192 = por %p190, %p191
      %p193 = scmp.ne.s32.totalorder %s179, %s180
      %p194 = scmp.eq.s32.totalorder %s20, 1
      %p195 = por %p193, %p194
      %p197 = scmp.ne.s32.totalorder %s180, %s196
      %p198 = scmp.eq.s32.totalorder %s20, 0
      %p199 = por %p197, %p198
      %p200 = scmp.le.s32.totalorder 1, %s14
      %p201 = scmp.lt.s32.totalorder %s14, 3
      %p202 = pnand %p200, %p201
      %p203 = pneg %p202
      // Predicated region
      $region9: #{detection_forward.1} parent=5 // pred_check
        _
      $region10: #{detection_forward.1} parent=5 // pred_check_branch
        %205 = sbr.rel (%p202) target = $region12
      $region11: #{detection_forward.1} parent=5 // pred_region
        %s206 = ssub.s32 %s14, 1
        // Predicated region
        $region13: #{detection_forward.1} parent=11 // pred_check
          %p207 = pneg %p73
        $region14: #{detection_forward.1} parent=11 // pred_check_branch
          %209 = sbr.rel (%p207) target = $region16
        $region15: #{detection_forward.1} parent=11 // pred_region
          _
        $region16: #{detection_forward.1} parent=11 // pred_fallthru
          _
        // Predicated region
        $region17: #{detection_forward.1} parent=11 // pred_check
          %p210 = pneg %p94
        $region18: #{detection_forward.1} parent=11 // pred_check_branch
          %212 = sbr.rel (%p210) target = $region20
        $region19: #{detection_forward.1} parent=11 // pred_region
          _
        $region20: #{detection_forward.1} parent=11 // pred_fallthru
          _
        // Predicated region
        $region21: #{detection_forward.1} parent=11 // pred_check
          %p213 = pneg %p115
        $region22: #{detection_forward.1} parent=11 // pred_check_branch
          %215 = sbr.rel (%p213) target = $region24
        $region23: #{detection_forward.1} parent=11 // pred_region
          _
        $region24: #{detection_forward.1} parent=11 // pred_fallthru
          _
        // Predicated region
        $region25: #{detection_forward.1} parent=11 // pred_check
          %p216 = pneg %p136
        $region26: #{detection_forward.1} parent=11 // pred_check_branch
          %218 = sbr.rel (%p216) target = $region28
        $region27: #{detection_forward.1} parent=11 // pred_region
          %220 = vsyncadd [#allocation3], 0
          %s222 = sshll.u32 %s4, 4
          %s223 = int_to_ptr.vmem [resolvable:$true] %s222
          %225 = dma.vmem_to_smem %s223, 16, [#allocation2], [#allocation3]
        $region28: #{detection_forward.1} parent=11 // pred_fallthru
          _
      $region12: #{detection_forward.1} parent=5 // pred_fallthru
        _
      %p226 = scmp.lt.s32.totalorder %s14, 2
      // Predicated region
      $region29: #{detection_forward.1} parent=5 // pred_check
        %p227 = pneg %p226
      $region30: #{detection_forward.1} parent=5 // pred_check_branch
        %229 = sbr.rel (%p227) target = $region32
      $region31: #{detection_forward.1} parent=5 // pred_region
        // Predicated region
        $region33: #{detection_forward.1} parent=31 // pred_check
          %p230 = pneg %p46
        $region34: #{detection_forward.1} parent=31 // pred_check_branch
          %232 = sbr.rel (%p230) target = $region36
        $region35: #{detection_forward.1} parent=31 // pred_region
          %p233 = scmp.lt.s32.totalorder %s21, 1
          %s234 = scalar_select %p233, %s21, 1
          %s235 = smul.addr %s234, 3
          %s236 = smul.addr %s235, 2
          %s237 = scalar_lea.vmem %s0, %s236
        $region36: #{detection_forward.1} parent=31 // pred_fallthru
          _
      $region32: #{detection_forward.1} parent=5 // pred_fallthru
        _
      %p238 = scmp.le.s32.totalorder 1, %s14
      %p239 = scmp.lt.s32.totalorder %s14, 3
      %p240 = pnand %p238, %p239
      %p241 = pneg %p240
      // Predicated region
      $region37: #{detection_forward.1} parent=5 // pred_check
        _
      $region38: #{detection_forward.1} parent=5 // pred_check_branch
        %243 = sbr.rel (%p240) target = $region40
      $region39: #{detection_forward.1} parent=5 // pred_region
        %s244 = ssub.s32 %s14, 1
        // Predicated region
        $region41: #{detection_forward.1} parent=39 // pred_check
          %p245 = pneg %p136
        $region42: #{detection_forward.1} parent=39 // pred_check_branch
          %247 = sbr.rel (%p245) target = $region44
        $region43: #{detection_forward.1} parent=39 // pred_region
          %249 = dma.done [#allocation3], 16
        $region44: #{detection_forward.1} parent=39 // pred_fallthru
          _
        %250 = sfence
        %p251 = scmp.lt.s32.totalorder %s23, 1
        %s252 = scalar_select %p251, %s23, 1
        %s253 = smul.addr %s252, 3
        %s254 = smul.addr %s253, 2
        %s255 = scalar_lea.vmem %s0, %s254
        %p256 = pneg %p52
        %p257 = pneg %p49
        %p258 = pneg %p73
        %p259 = pneg %p70
        %p260 = pneg %p94
        %p261 = pneg %p91
        %p262 = pneg %p115
        %p263 = pneg %p112
        %p264 = pneg %p136
        %p265 = pneg %p133
        %p266 = pneg %p164
        %p267 = pneg %p161
        %s268 = smul.u32 3, %s24
        %p269 = scmp.lt.s32.totalorder %s23, 1
        %s270 = scalar_select %p269, %s23, 1
        %p271 = scmp.lt.s32.totalorder %s268, 2
        %s272 = scalar_select %p271, %s268, 2
        %s273 = smul.addr %s270, 3
        %s274 = sadd.s32 %s272, %s273
        %s275 = scalar_lea.vmem %s5, %s274
        %p276 = pneg %p192
        %p277 = pneg %p189
        %s278 = smul.u32 3, %s24
        %p279 = scmp.lt.s32.totalorder %s23, 1
        %s280 = scalar_select %p279, %s23, 1
        %p281 = scmp.lt.s32.totalorder %s278, 2
        %s282 = scalar_select %p281, %s278, 2
        %s283 = smul.addr %s280, 3
        %s284 = sadd.s32 %s282, %s283
        %s285 = scalar_lea.vmem %s6, %s284
        %p286 = scmp.lt.s32.totalorder %s23, 1
        %s287 = scalar_select %p286, %s23, 1
        %s288 = smul.addr %s287, 3
        %s289 = smul.addr %s288, 2
        %s290 = scalar_lea.vmem %s0, %s289
        %s291 = smul.u32 3, %s24
        %p292 = scmp.lt.s32.totalorder %s23, 1
        %s293 = scalar_select %p292, %s23, 1
        %p294 = scmp.lt.s32.totalorder %s291, 2
        %s295 = scalar_select %p294, %s291, 2
        %s296 = smul.addr %s293, 3
        %s297 = sadd.s32 %s295, %s296
        %s298 = scalar_lea.vmem %s5, %s297
        %s299 = smul.u32 3, %s24
        %s300 = smul.u32 3, %s24
        %p301 = scmp.lt.s32.totalorder %s23, 1
        %s302 = scalar_select %p301, %s23, 1
        %p303 = scmp.lt.s32.totalorder %s300, 2
        %s304 = scalar_select %p303, %s300, 2
        %s305 = smul.addr %s302, 3
        %s306 = sadd.s32 %s304, %s305
        %s307 = scalar_lea.vmem %s6, %s306
        %s308 = smul.u32 3, %s24
        %v310 = vld [vmem:[%s290] sm:$0x3f]
        %v311 = vld [vmem:[%s1] sm:$0xf]
        %v312 = vld [vmem:[%s1 + $0x4] sm:$0xf]
        %v313 = vld [vmem:[%s1 + $0x8] sm:$0xf]
        %v314 = vld [vmem:[%s1 + $0xc] sm:$0xf]
        %s315 = scalar_lea.vmem %s1, 16
        %v316 = vld [vmem:[%s315] sm:$0xf]
        %v317 = vld [vmem:[%s315 + $0x4] sm:$0xf]
        %v318 = vld [vmem:[%s315 + $0x8] sm:$0xf]
        %v319 = vld [vmem:[%s315 + $0xc] sm:$0xf]
        %v324 = vunpack.c.l.b16 %v316
        %v325 = vunpack.c.l.b16 %v317
        %v326 = vunpack.c.l.b16 %v318
        %v327 = vunpack.c.l.b16 %v319
        %v328 = vpack.c.b16 %v325, %v324
        %v329 = vpack.c.b16 %v327, %v326
        %331 = vst [vmem:[#allocation1] ss:$4 sm:$0xff] %v310
        %v332 = vld.sshfl [vmem:[#allocation1] sm:$0xff pattern:$0x73625140]
        %v334 = vld.sshfl [vmem:[#allocation1 + $0x8] sm:$0xff pattern:$0x73625140]
        %v336 = vld.sshfl [vmem:[#allocation1 + $0x10] sm:$0xff pattern:$0x73625140]
        %338 = vrot.lane.b32.xlu0 %v332, 127
        %v339 = vpop.permute.xlu0 %338
        %340 = vrot.lane.b32.xlu0 %v334, 127
        %v341 = vpop.permute.xlu0 %340
        %342 = vrot.lane.b32.xlu0 %v336, 127
        %v343 = vpop.permute.xlu0 %342
        %vm344 = vcmask 1039360
        %v345 = vsel %vm344, %v339, %v341
        %v346 = vsel %vm344, %v341, %v343
        %vm347 = vcmask 31744
        %v349 = vsel %vm347, %v328, 0
        %v352 = vsel %vm347, %v329, 0
        %vm354 = vcmask 1041408
        %v356 = vsel %vm354, %v345, 0
        %v359 = vsel %vm354, %v346, 0
        %v362 = vsel %vm354, %v343, 0
        %364 = vmatpush.bf16.msra.mxu0 0
        %365 = vmatpush.bf16.msra.mxu0 0
        %366 = vmatpush.bf16.msra.mxu0 0
        %367 = vmatpush.bf16.msra.mxu0 0
        %368 = vmatpush.bf16.msra.mxu0 0
        %369 = vmatpush.bf16.msra.mxu0 0
        %370 = vmatpush.bf16.msra.mxu0 0
        %371 = vmatpush.bf16.msra.mxu0 %v356
        %372 = vmatmul.bf16.gmra.mxu0 %v349
        %v373 = vpop.f32.mrf.mxu0
        %v374 = vadd.f32 0.0, %v373
        %v375 = vpop.f32.mrf.mxu0
        %v376 = vadd.f32 0.0, %v375
        %377 = vmatmul.bf16.gmra.mxu0 %v352
        %v378 = vpop.f32.mrf.mxu0
        %v379 = vadd.f32 0.0, %v378
        %v380 = vpop.f32.mrf.mxu0
        %v381 = vadd.f32 0.0, %v380
        %382 = vdwg.mxu0
        %383 = vmatpush.bf16.msra.mxu0 0
        %384 = vmatpush.bf16.msra.mxu0 0
        %385 = vmatpush.bf16.msra.mxu0 0
        %386 = vmatpush.bf16.msra.mxu0 0
        %387 = vmatpush.bf16.msra.mxu0 0
        %388 = vmatpush.bf16.msra.mxu0 0
        %389 = vmatpush.bf16.msra.mxu0 0
        %390 = vmatpush.bf16.msra.mxu0 %v359
        %391 = vmatmul.bf16.gmra.mxu0 %v349
        %v392 = vpop.f32.mrf.mxu0
        %v393 = vadd.f32 0.0, %v392
        %v394 = vpop.f32.mrf.mxu0
        %v395 = vadd.f32 0.0, %v394
        %396 = vmatmul.bf16.gmra.mxu0 %v352
        %v397 = vpop.f32.mrf.mxu0
        %v398 = vadd.f32 0.0, %v397
        %v399 = vpop.f32.mrf.mxu0
        %v400 = vadd.f32 0.0, %v399
        %401 = vdwg.mxu0
        %402 = vmatpush.bf16.msra.mxu0 0
        %403 = vmatpush.bf16.msra.mxu0 0
        %404 = vmatpush.bf16.msra.mxu0 0
        %405 = vmatpush.bf16.msra.mxu0 0
        %406 = vmatpush.bf16.msra.mxu0 0
        %407 = vmatpush.bf16.msra.mxu0 0
        %408 = vmatpush.bf16.msra.mxu0 0
        %409 = vmatpush.bf16.msra.mxu0 %v362
        %410 = vmatmul.bf16.gmra.mxu0 %v349
        %v411 = vpop.f32.mrf.mxu0
        %v412 = vadd.f32 0.0, %v411
        %v413 = vpop.f32.mrf.mxu0
        %v414 = vadd.f32 0.0, %v413
        %415 = vmatmul.bf16.gmra.mxu0 %v352
        %v416 = vpop.f32.mrf.mxu0
        %v417 = vadd.f32 0.0, %v416
        %v418 = vpop.f32.mrf.mxu0
        %v419 = vadd.f32 0.0, %v418
        %420 = vdwg.mxu0
        %v425 = vunpack.c.l.b16 %v311
        %v426 = vunpack.c.l.b16 %v312
        %v427 = vunpack.c.l.b16 %v313
        %v428 = vunpack.c.l.b16 %v314
        %v429 = vpack.c.b16 %v426, %v425
        %v430 = vpack.c.b16 %v428, %v427
        %431 = vst [vmem:[#allocation1] ss:$4 sm:$0xff] %v310
        %v432 = vld.sshfl [vmem:[#allocation1] sm:$0xff pattern:$0x73625140]
        %v433 = vld.sshfl [vmem:[#allocation1 + $0x8] sm:$0xff pattern:$0x73625140]
        %v434 = vld.sshfl [vmem:[#allocation1 + $0x10] sm:$0xff pattern:$0x73625140]
        %v436 = vsel %vm347, %v429, 0
        %v439 = vsel %vm347, %v430, 0
        %v441 = vsel %vm354, %v432, 0
        %v443 = vsel %vm354, %v433, 0
        %v445 = vsel %vm354, %v434, 0
        %447 = vmatpush.bf16.msra.mxu0 0
        %448 = vmatpush.bf16.msra.mxu0 0
        %449 = vmatpush.bf16.msra.mxu0 0
        %450 = vmatpush.bf16.msra.mxu0 0
        %451 = vmatpush.bf16.msra.mxu0 0
        %452 = vmatpush.bf16.msra.mxu0 0
        %453 = vmatpush.bf16.msra.mxu0 0
        %454 = vmatpush.bf16.msra.mxu0 %v441
        %455 = vmatmul.bf16.gmra.mxu0 %v436
        %v456 = vpop.f32.mrf.mxu0
        %v457 = vadd.f32 %v374, %v456
        %v458 = vpop.f32.mrf.mxu0
        %v459 = vadd.f32 %v376, %v458
        %460 = vmatmul.bf16.gmra.mxu0 %v439
        %v461 = vpop.f32.mrf.mxu0
        %v462 = vadd.f32 %v379, %v461
        %v463 = vpop.f32.mrf.mxu0
        %v464 = vadd.f32 %v381, %v463
        %465 = vdwg.mxu0
        %466 = vmatpush.bf16.msra.mxu0 0
        %467 = vmatpush.bf16.msra.mxu0 0
        %468 = vmatpush.bf16.msra.mxu0 0
        %469 = vmatpush.bf16.msra.mxu0 0
        %470 = vmatpush.bf16.msra.mxu0 0
        %471 = vmatpush.bf16.msra.mxu0 0
        %472 = vmatpush.bf16.msra.mxu0 0
        %473 = vmatpush.bf16.msra.mxu0 %v443
        %474 = vmatmul.bf16.gmra.mxu0 %v436
        %v475 = vpop.f32.mrf.mxu0
        %v476 = vadd.f32 %v393, %v475
        %v477 = vpop.f32.mrf.mxu0
        %v478 = vadd.f32 %v395, %v477
        %479 = vmatmul.bf16.gmra.mxu0 %v439
        %v480 = vpop.f32.mrf.mxu0
        %v481 = vadd.f32 %v398, %v480
        %v482 = vpop.f32.mrf.mxu0
        %v483 = vadd.f32 %v400, %v482
        %484 = vdwg.mxu0
        %485 = vmatpush.bf16.msra.mxu0 0
        %486 = vmatpush.bf16.msra.mxu0 0
        %487 = vmatpush.bf16.msra.mxu0 0
        %488 = vmatpush.bf16.msra.mxu0 0
        %489 = vmatpush.bf16.msra.mxu0 0
        %490 = vmatpush.bf16.msra.mxu0 0
        %491 = vmatpush.bf16.msra.mxu0 0
        %492 = vmatpush.bf16.msra.mxu0 %v445
        %493 = vmatmul.bf16.gmra.mxu0 %v436
        %v494 = vpop.f32.mrf.mxu0
        %v495 = vadd.f32 %v412, %v494
        %v496 = vpop.f32.mrf.mxu0
        %v497 = vadd.f32 %v414, %v496
        %498 = vmatmul.bf16.gmra.mxu0 %v439
        %v499 = vpop.f32.mrf.mxu0
        %v500 = vadd.f32 %v417, %v499
        %v501 = vpop.f32.mrf.mxu0
        %v502 = vadd.f32 %v419, %v501
        %503 = vdwg.mxu0
        %v504 = vld [vmem:[%s290] sm:$0x3f]
        %s505 = scalar_lea.vmem %s1, 32
        %v506 = vld [vmem:[%s505] sm:$0xf]
        %v507 = vld [vmem:[%s505 + $0x4] sm:$0xf]
        %v508 = vld [vmem:[%s505 + $0x8] sm:$0xf]
        %v509 = vld [vmem:[%s505 + $0xc] sm:$0xf]
        %v514 = vunpack.c.l.b16 %v506
        %v515 = vunpack.c.l.b16 %v507
        %v516 = vunpack.c.l.b16 %v508
        %v517 = vunpack.c.l.b16 %v509
        %v518 = vpack.c.b16 %v515, %v514
        %v519 = vpack.c.b16 %v517, %v516
        %521 = vst [vmem:[#allocation1] ss:$4 sm:$0xff] %v504
        %v522 = vld.sshfl [vmem:[#allocation1] sm:$0xff pattern:$0x73625140]
        %v524 = vld.sshfl [vmem:[#allocation1 + $0x8] sm:$0xff pattern:$0x73625140]
        %v526 = vld.sshfl [vmem:[#allocation1 + $0x10] sm:$0xff pattern:$0x73625140]
        %528 = vrot.lane.b32.xlu0 %v522, 126
        %v529 = vpop.permute.xlu0 %528
        %530 = vrot.lane.b32.xlu0 %v524, 126
        %v531 = vpop.permute.xlu0 %530
        %532 = vrot.lane.b32.xlu0 %v526, 126
        %v533 = vpop.permute.xlu0 %532
        %vm534 = vcmask 1031168
        %v535 = vsel %vm534, %v529, %v531
        %v536 = vsel %vm534, %v531, %v533
        %v538 = vsel %vm347, %v518, 0
        %v541 = vsel %vm347, %v519, 0
        %v544 = vsel %vm354, %v535, 0
        %v547 = vsel %vm354, %v536, 0
        %v550 = vsel %vm354, %v533, 0
        %552 = vmatpush.bf16.msra.mxu0 0
        %553 = vmatpush.bf16.msra.mxu0 0
        %554 = vmatpush.bf16.msra.mxu0 0
        %555 = vmatpush.bf16.msra.mxu0 0
        %556 = vmatpush.bf16.msra.mxu0 0
        %557 = vmatpush.bf16.msra.mxu0 0
        %558 = vmatpush.bf16.msra.mxu0 0
        %559 = vmatpush.bf16.msra.mxu0 %v544
        %560 = vmatmul.bf16.gmra.mxu0 %v538
        %v561 = vpop.f32.mrf.mxu0
        %v562 = vadd.f32 0.0, %v561
        %v563 = vpop.f32.mrf.mxu0
        %v564 = vadd.f32 0.0, %v563
        %565 = vmatmul.bf16.gmra.mxu0 %v541
        %v566 = vpop.f32.mrf.mxu0
        %v567 = vadd.f32 0.0, %v566
        %v568 = vpop.f32.mrf.mxu0
        %v569 = vadd.f32 0.0, %v568
        %570 = vdwg.mxu0
        %571 = vmatpush.bf16.msra.mxu0 0
        %572 = vmatpush.bf16.msra.mxu0 0
        %573 = vmatpush.bf16.msra.mxu0 0
        %574 = vmatpush.bf16.msra.mxu0 0
        %575 = vmatpush.bf16.msra.mxu0 0
        %576 = vmatpush.bf16.msra.mxu0 0
        %577 = vmatpush.bf16.msra.mxu0 0
        %578 = vmatpush.bf16.msra.mxu0 %v547
        %579 = vmatmul.bf16.gmra.mxu0 %v538
        %v580 = vpop.f32.mrf.mxu0
        %v581 = vadd.f32 0.0, %v580
        %v582 = vpop.f32.mrf.mxu0
        %v583 = vadd.f32 0.0, %v582
        %584 = vmatmul.bf16.gmra.mxu0 %v541
        %v585 = vpop.f32.mrf.mxu0
        %v586 = vadd.f32 0.0, %v585
        %v587 = vpop.f32.mrf.mxu0
        %v588 = vadd.f32 0.0, %v587
        %589 = vdwg.mxu0
        %590 = vmatpush.bf16.msra.mxu0 0
        %591 = vmatpush.bf16.msra.mxu0 0
        %592 = vmatpush.bf16.msra.mxu0 0
        %593 = vmatpush.bf16.msra.mxu0 0
        %594 = vmatpush.bf16.msra.mxu0 0
        %595 = vmatpush.bf16.msra.mxu0 0
        %596 = vmatpush.bf16.msra.mxu0 0
        %597 = vmatpush.bf16.msra.mxu0 %v550
        %598 = vmatmul.bf16.gmra.mxu0 %v538
        %v599 = vpop.f32.mrf.mxu0
        %v600 = vadd.f32 0.0, %v599
        %v601 = vpop.f32.mrf.mxu0
        %v602 = vadd.f32 0.0, %v601
        %603 = vmatmul.bf16.gmra.mxu0 %v541
        %v604 = vpop.f32.mrf.mxu0
        %v605 = vadd.f32 0.0, %v604
        %v606 = vpop.f32.mrf.mxu0
        %v607 = vadd.f32 0.0, %v606
        %608 = vdwg.mxu0
        %v609 = vadd.f32 %v457, %v562
        %v610 = vadd.f32 %v476, %v581
        %v611 = vadd.f32 %v495, %v600
        %v612 = vadd.f32 %v459, %v564
        %v613 = vadd.f32 %v478, %v583
        %v614 = vadd.f32 %v497, %v602
        %v615 = vadd.f32 %v462, %v567
        %v616 = vadd.f32 %v481, %v586
        %v617 = vadd.f32 %v500, %v605
        %v618 = vadd.f32 %v464, %v569
        %v619 = vadd.f32 %v483, %v588
        %v620 = vadd.f32 %v502, %v607
        %v621 = vld [vmem:[%s290] sm:$0x3f]
        %s622 = scalar_lea.vmem %s1, 48
        %v623 = vld [vmem:[%s622] sm:$0xf]
        %v624 = vld [vmem:[%s622 + $0x4] sm:$0xf]
        %v625 = vld [vmem:[%s622 + $0x8] sm:$0xf]
        %v626 = vld [vmem:[%s622 + $0xc] sm:$0xf]
        %v631 = vunpack.c.l.b16 %v623
        %v632 = vunpack.c.l.b16 %v624
        %v633 = vunpack.c.l.b16 %v625
        %v634 = vunpack.c.l.b16 %v626
        %v635 = vpack.c.b16 %v632, %v631
        %v636 = vpack.c.b16 %v634, %v633
        %638 = vst [vmem:[#allocation1] ss:$4 sm:$0xff] %v621
        %v639 = vld.sshfl [vmem:[#allocation1] sm:$0xff pattern:$0x73625140]
        %v641 = vld.sshfl [vmem:[#allocation1 + $0x8] sm:$0xff pattern:$0x73625140]
        %v643 = vld.sshfl [vmem:[#allocation1 + $0x10] sm:$0xff pattern:$0x73625140]
        %645 = vrot.lane.b32.xlu0 %v639, 110
        %v646 = vpop.permute.xlu0 %645
        %647 = vrot.lane.b32.xlu0 %v641, 110
        %v648 = vpop.permute.xlu0 %647
        %649 = vrot.lane.b32.xlu0 %v643, 110
        %v650 = vpop.permute.xlu0 %649
        %vm651 = vcmask 900096
        %v652 = vsel %vm651, %v646, %v648
        %v653 = vsel %vm651, %v648, %v650
        %v655 = vsel %vm347, %v635, 0
        %v658 = vsel %vm347, %v636, 0
        %v661 = vsel %vm354, %v652, 0
        %v664 = vsel %vm354, %v653, 0
        %v667 = vsel %vm354, %v650, 0
        %669 = vmatpush.bf16.msra.mxu0 0
        %670 = vmatpush.bf16.msra.mxu0 0
        %671 = vmatpush.bf16.msra.mxu0 0
        %672 = vmatpush.bf16.msra.mxu0 0
        %673 = vmatpush.bf16.msra.mxu0 0
        %674 = vmatpush.bf16.msra.mxu0 0
        %675 = vmatpush.bf16.msra.mxu0 0
        %676 = vmatpush.bf16.msra.mxu0 %v661
        %677 = vmatmul.bf16.gmra.mxu0 %v655
        %v678 = vpop.f32.mrf.mxu0
        %v679 = vadd.f32 0.0, %v678
        %v680 = vpop.f32.mrf.mxu0
        %v681 = vadd.f32 0.0, %v680
        %682 = vmatmul.bf16.gmra.mxu0 %v658
        %v683 = vpop.f32.mrf.mxu0
        %v684 = vadd.f32 0.0, %v683
        %v685 = vpop.f32.mrf.mxu0
        %v686 = vadd.f32 0.0, %v685
        %687 = vdwg.mxu0
        %688 = vmatpush.bf16.msra.mxu0 0
        %689 = vmatpush.bf16.msra.mxu0 0
        %690 = vmatpush.bf16.msra.mxu0 0
        %691 = vmatpush.bf16.msra.mxu0 0
        %692 = vmatpush.bf16.msra.mxu0 0
        %693 = vmatpush.bf16.msra.mxu0 0
        %694 = vmatpush.bf16.msra.mxu0 0
        %695 = vmatpush.bf16.msra.mxu0 %v664
        %696 = vmatmul.bf16.gmra.mxu0 %v655
        %v697 = vpop.f32.mrf.mxu0
        %v698 = vadd.f32 0.0, %v697
        %v699 = vpop.f32.mrf.mxu0
        %v700 = vadd.f32 0.0, %v699
        %701 = vmatmul.bf16.gmra.mxu0 %v658
        %v702 = vpop.f32.mrf.mxu0
        %v703 = vadd.f32 0.0, %v702
        %v704 = vpop.f32.mrf.mxu0
        %v705 = vadd.f32 0.0, %v704
        %706 = vdwg.mxu0
        %707 = vmatpush.bf16.msra.mxu0 0
        %708 = vmatpush.bf16.msra.mxu0 0
        %709 = vmatpush.bf16.msra.mxu0 0
        %710 = vmatpush.bf16.msra.mxu0 0
        %711 = vmatpush.bf16.msra.mxu0 0
        %712 = vmatpush.bf16.msra.mxu0 0
        %713 = vmatpush.bf16.msra.mxu0 0
        %714 = vmatpush.bf16.msra.mxu0 %v667
        %715 = vmatmul.bf16.gmra.mxu0 %v655
        %v716 = vpop.f32.mrf.mxu0
        %v717 = vadd.f32 0.0, %v716
        %v718 = vpop.f32.mrf.mxu0
        %v719 = vadd.f32 0.0, %v718
        %720 = vmatmul.bf16.gmra.mxu0 %v658
        %v721 = vpop.f32.mrf.mxu0
        %v722 = vadd.f32 0.0, %v721
        %v723 = vpop.f32.mrf.mxu0
        %v724 = vadd.f32 0.0, %v723
        %725 = vdwg.mxu0
        %v726 = vadd.f32 %v609, %v679
        %v727 = vadd.f32 %v610, %v698
        %v728 = vadd.f32 %v611, %v717
        %v729 = vadd.f32 %v612, %v681
        %v730 = vadd.f32 %v613, %v700
        %v731 = vadd.f32 %v614, %v719
        %v732 = vadd.f32 %v615, %v684
        %v733 = vadd.f32 %v616, %v703
        %v734 = vadd.f32 %v617, %v722
        %v735 = vadd.f32 %v618, %v686
        %v736 = vadd.f32 %v619, %v705
        %v737 = vadd.f32 %v620, %v724
        %v738 = vld [vmem:[%s290] sm:$0x3f]
        %s739 = scalar_lea.vmem %s1, 64
        %v740 = vld [vmem:[%s739] sm:$0xf]
        %v741 = vld [vmem:[%s739 + $0x4] sm:$0xf]
        %v742 = vld [vmem:[%s739 + $0x8] sm:$0xf]
        %v743 = vld [vmem:[%s739 + $0xc] sm:$0xf]
        %v748 = vunpack.c.l.b16 %v740
        %v749 = vunpack.c.l.b16 %v741
        %v750 = vunpack.c.l.b16 %v742
        %v751 = vunpack.c.l.b16 %v743
        %v752 = vpack.c.b16 %v749, %v748
        %v753 = vpack.c.b16 %v751, %v750
        %755 = vst [vmem:[#allocation1] ss:$4 sm:$0xff] %v738
        %v756 = vld.sshfl [vmem:[#allocation1] sm:$0xff pattern:$0x73625140]
        %v758 = vld.sshfl [vmem:[#allocation1 + $0x8] sm:$0xff pattern:$0x73625140]
        %v760 = vld.sshfl [vmem:[#allocation1 + $0x10] sm:$0xff pattern:$0x73625140]
        %762 = vrot.lane.b32.xlu0 %v756, 109
        %v763 = vpop.permute.xlu0 %762
        %764 = vrot.lane.b32.xlu0 %v758, 109
        %v765 = vpop.permute.xlu0 %764
        %766 = vrot.lane.b32.xlu0 %v760, 109
        %v767 = vpop.permute.xlu0 %766
        %vm768 = vcmask 891904
        %v769 = vsel %vm768, %v763, %v765
        %v770 = vsel %vm768, %v765, %v767
        %v772 = vsel %vm347, %v752, 0
        %v775 = vsel %vm347, %v753, 0
        %v778 = vsel %vm354, %v769, 0
        %v781 = vsel %vm354, %v770, 0
        %v784 = vsel %vm354, %v767, 0
        %786 = vmatpush.bf16.msra.mxu0 0
        %787 = vmatpush.bf16.msra.mxu0 0
        %788 = vmatpush.bf16.msra.mxu0 0
        %789 = vmatpush.bf16.msra.mxu0 0
        %790 = vmatpush.bf16.msra.mxu0 0
        %791 = vmatpush.bf16.msra.mxu0 0
        %792 = vmatpush.bf16.msra.mxu0 0
        %793 = vmatpush.bf16.msra.mxu0 %v778
        %794 = vmatmul.bf16.gmra.mxu0 %v772
        %v795 = vpop.f32.mrf.mxu0
        %v796 = vadd.f32 0.0, %v795
        %v797 = vpop.f32.mrf.mxu0
        %v798 = vadd.f32 0.0, %v797
        %799 = vmatmul.bf16.gmra.mxu0 %v775
        %v800 = vpop.f32.mrf.mxu0
        %v801 = vadd.f32 0.0, %v800
        %v802 = vpop.f32.mrf.mxu0
        %v803 = vadd.f32 0.0, %v802
        %804 = vdwg.mxu0
        %805 = vmatpush.bf16.msra.mxu0 0
        %806 = vmatpush.bf16.msra.mxu0 0
        %807 = vmatpush.bf16.msra.mxu0 0
        %808 = vmatpush.bf16.msra.mxu0 0
        %809 = vmatpush.bf16.msra.mxu0 0
        %810 = vmatpush.bf16.msra.mxu0 0
        %811 = vmatpush.bf16.msra.mxu0 0
        %812 = vmatpush.bf16.msra.mxu0 %v781
        %813 = vmatmul.bf16.gmra.mxu0 %v772
        %v814 = vpop.f32.mrf.mxu0
        %v815 = vadd.f32 0.0, %v814
        %v816 = vpop.f32.mrf.mxu0
        %v817 = vadd.f32 0.0, %v816
        %818 = vmatmul.bf16.gmra.mxu0 %v775
        %v819 = vpop.f32.mrf.mxu0
        %v820 = vadd.f32 0.0, %v819
        %v821 = vpop.f32.mrf.mxu0
        %v822 = vadd.f32 0.0, %v821
        %823 = vdwg.mxu0
        %824 = vmatpush.bf16.msra.mxu0 0
        %825 = vmatpush.bf16.msra.mxu0 0
        %826 = vmatpush.bf16.msra.mxu0 0
        %827 = vmatpush.bf16.msra.mxu0 0
        %828 = vmatpush.bf16.msra.mxu0 0
        %829 = vmatpush.bf16.msra.mxu0 0
        %830 = vmatpush.bf16.msra.mxu0 0
        %831 = vmatpush.bf16.msra.mxu0 %v784
        %832 = vmatmul.bf16.gmra.mxu0 %v772
        %v833 = vpop.f32.mrf.mxu0
        %v834 = vadd.f32 0.0, %v833
        %v835 = vpop.f32.mrf.mxu0
        %v836 = vadd.f32 0.0, %v835
        %837 = vmatmul.bf16.gmra.mxu0 %v775
        %v838 = vpop.f32.mrf.mxu0
        %v839 = vadd.f32 0.0, %v838
        %v840 = vpop.f32.mrf.mxu0
        %v841 = vadd.f32 0.0, %v840
        %842 = vdwg.mxu0
        %v843 = vadd.f32 %v726, %v796
        %v844 = vadd.f32 %v727, %v815
        %v845 = vadd.f32 %v728, %v834
        %v846 = vadd.f32 %v729, %v798
        %v847 = vadd.f32 %v730, %v817
        %v848 = vadd.f32 %v731, %v836
        %v849 = vadd.f32 %v732, %v801
        %v850 = vadd.f32 %v733, %v820
        %v851 = vadd.f32 %v734, %v839
        %v852 = vadd.f32 %v735, %v803
        %v853 = vadd.f32 %v736, %v822
        %v854 = vadd.f32 %v737, %v841
        %v855 = vld [vmem:[%s290] sm:$0x3f]
        %s856 = scalar_lea.vmem %s1, 80
        %v857 = vld [vmem:[%s856] sm:$0xf]
        %v858 = vld [vmem:[%s856 + $0x4] sm:$0xf]
        %v859 = vld [vmem:[%s856 + $0x8] sm:$0xf]
        %v860 = vld [vmem:[%s856 + $0xc] sm:$0xf]
        %v865 = vunpack.c.l.b16 %v857
        %v866 = vunpack.c.l.b16 %v858
        %v867 = vunpack.c.l.b16 %v859
        %v868 = vunpack.c.l.b16 %v860
        %v869 = vpack.c.b16 %v866, %v865
        %v870 = vpack.c.b16 %v868, %v867
        %872 = vst [vmem:[#allocation1] ss:$4 sm:$0xff] %v855
        %v873 = vld.sshfl [vmem:[#allocation1] sm:$0xff pattern:$0x73625140]
        %v875 = vld.sshfl [vmem:[#allocation1 + $0x8] sm:$0xff pattern:$0x73625140]
        %v877 = vld.sshfl [vmem:[#allocation1 + $0x10] sm:$0xff pattern:$0x73625140]
        %879 = vrot.lane.b32.xlu0 %v873, 108
        %v880 = vpop.permute.xlu0 %879
        %881 = vrot.lane.b32.xlu0 %v875, 108
        %v882 = vpop.permute.xlu0 %881
        %883 = vrot.lane.b32.xlu0 %v877, 108
        %v884 = vpop.permute.xlu0 %883
        %vm885 = vcmask 883712
        %v886 = vsel %vm885, %v880, %v882
        %v887 = vsel %vm885, %v882, %v884
        %v889 = vsel %vm347, %v869, 0
        %v892 = vsel %vm347, %v870, 0
        %v895 = vsel %vm354, %v886, 0
        %v898 = vsel %vm354, %v887, 0
        %v901 = vsel %vm354, %v884, 0
        %903 = vmatpush.bf16.msra.mxu0 0
        %904 = vmatpush.bf16.msra.mxu0 0
        %905 = vmatpush.bf16.msra.mxu0 0
        %906 = vmatpush.bf16.msra.mxu0 0
        %907 = vmatpush.bf16.msra.mxu0 0
        %908 = vmatpush.bf16.msra.mxu0 0
        %909 = vmatpush.bf16.msra.mxu0 0
        %910 = vmatpush.bf16.msra.mxu0 %v895
        %911 = vmatmul.bf16.gmra.mxu0 %v889
        %v912 = vpop.f32.mrf.mxu0
        %v913 = vadd.f32 0.0, %v912
        %v914 = vpop.f32.mrf.mxu0
        %v915 = vadd.f32 0.0, %v914
        %916 = vmatmul.bf16.gmra.mxu0 %v892
        %v917 = vpop.f32.mrf.mxu0
        %v918 = vadd.f32 0.0, %v917
        %v919 = vpop.f32.mrf.mxu0
        %v920 = vadd.f32 0.0, %v919
        %921 = vdwg.mxu0
        %922 = vmatpush.bf16.msra.mxu0 0
        %923 = vmatpush.bf16.msra.mxu0 0
        %924 = vmatpush.bf16.msra.mxu0 0
        %925 = vmatpush.bf16.msra.mxu0 0
        %926 = vmatpush.bf16.msra.mxu0 0
        %927 = vmatpush.bf16.msra.mxu0 0
        %928 = vmatpush.bf16.msra.mxu0 0
        %929 = vmatpush.bf16.msra.mxu0 %v898
        %930 = vmatmul.bf16.gmra.mxu0 %v889
        %v931 = vpop.f32.mrf.mxu0
        %v932 = vadd.f32 0.0, %v931
        %v933 = vpop.f32.mrf.mxu0
        %v934 = vadd.f32 0.0, %v933
        %935 = vmatmul.bf16.gmra.mxu0 %v892
        %v936 = vpop.f32.mrf.mxu0
        %v937 = vadd.f32 0.0, %v936
        %v938 = vpop.f32.mrf.mxu0
        %v939 = vadd.f32 0.0, %v938
        %940 = vdwg.mxu0
        %941 = vmatpush.bf16.msra.mxu0 0
        %942 = vmatpush.bf16.msra.mxu0 0
        %943 = vmatpush.bf16.msra.mxu0 0
        %944 = vmatpush.bf16.msra.mxu0 0
        %945 = vmatpush.bf16.msra.mxu0 0
        %946 = vmatpush.bf16.msra.mxu0 0
        %947 = vmatpush.bf16.msra.mxu0 0
        %948 = vmatpush.bf16.msra.mxu0 %v901
        %949 = vmatmul.bf16.gmra.mxu0 %v889
        %v950 = vpop.f32.mrf.mxu0
        %v951 = vadd.f32 0.0, %v950
        %v952 = vpop.f32.mrf.mxu0
        %v953 = vadd.f32 0.0, %v952
        %954 = vmatmul.bf16.gmra.mxu0 %v892
        %v955 = vpop.f32.mrf.mxu0
        %v956 = vadd.f32 0.0, %v955
        %v957 = vpop.f32.mrf.mxu0
        %v958 = vadd.f32 0.0, %v957
        %959 = vdwg.mxu0
        %v960 = vadd.f32 %v843, %v913
        %v961 = vadd.f32 %v844, %v932
        %v962 = vadd.f32 %v845, %v951
        %v963 = vadd.f32 %v846, %v915
        %v964 = vadd.f32 %v847, %v934
        %v965 = vadd.f32 %v848, %v953
        %v966 = vadd.f32 %v849, %v918
        %v967 = vadd.f32 %v850, %v937
        %v968 = vadd.f32 %v851, %v956
        %v969 = vadd.f32 %v852, %v920
        %v970 = vadd.f32 %v853, %v939
        %v971 = vadd.f32 %v854, %v958
        %v972 = vld [vmem:[%s290] sm:$0x3f]
        %s973 = scalar_lea.vmem %s1, 96
        %v974 = vld [vmem:[%s973] sm:$0xf]
        %v975 = vld [vmem:[%s973 + $0x4] sm:$0xf]
        %v976 = vld [vmem:[%s973 + $0x8] sm:$0xf]
        %v977 = vld [vmem:[%s973 + $0xc] sm:$0xf]
        %v982 = vunpack.c.l.b16 %v974
        %v983 = vunpack.c.l.b16 %v975
        %v984 = vunpack.c.l.b16 %v976
        %v985 = vunpack.c.l.b16 %v977
        %v986 = vpack.c.b16 %v983, %v982
        %v987 = vpack.c.b16 %v985, %v984
        %989 = vst [vmem:[#allocation1] ss:$4 sm:$0xff] %v972
        %v990 = vld.sshfl [vmem:[#allocation1] sm:$0xff pattern:$0x73625140]
        %v992 = vld.sshfl [vmem:[#allocation1 + $0x8] sm:$0xff pattern:$0x73625140]
        %v994 = vld.sshfl [vmem:[#allocation1 + $0x10] sm:$0xff pattern:$0x73625140]
        %996 = vrot.lane.b32.xlu0 %v990, 92
        %v997 = vpop.permute.xlu0 %996
        %998 = vrot.lane.b32.xlu0 %v992, 92
        %v999 = vpop.permute.xlu0 %998
        %1000 = vrot.lane.b32.xlu0 %v994, 92
        %v1001 = vpop.permute.xlu0 %1000
        %vm1002 = vcmask 752640
        %v1003 = vsel %vm1002, %v997, %v999
        %v1004 = vsel %vm1002, %v999, %v1001
        %v1006 = vsel %vm347, %v986, 0
        %v1009 = vsel %vm347, %v987, 0
        %v1012 = vsel %vm354, %v1003, 0
        %v1015 = vsel %vm354, %v1004, 0
        %v1018 = vsel %vm354, %v1001, 0
        %1020 = vmatpush.bf16.msra.mxu0 0
        %1021 = vmatpush.bf16.msra.mxu0 0
        %1022 = vmatpush.bf16.msra.mxu0 0
        %1023 = vmatpush.bf16.msra.mxu0 0
        %1024 = vmatpush.bf16.msra.mxu0 0
        %1025 = vmatpush.bf16.msra.mxu0 0
        %1026 = vmatpush.bf16.msra.mxu0 0
        %1027 = vmatpush.bf16.msra.mxu0 %v1012
        %1028 = vmatmul.bf16.gmra.mxu0 %v1006
        %v1029 = vpop.f32.mrf.mxu0
        %v1030 = vadd.f32 0.0, %v1029
        %v1031 = vpop.f32.mrf.mxu0
        %v1032 = vadd.f32 0.0, %v1031
        %1033 = vmatmul.bf16.gmra.mxu0 %v1009
        %v1034 = vpop.f32.mrf.mxu0
        %v1035 = vadd.f32 0.0, %v1034
        %v1036 = vpop.f32.mrf.mxu0
        %v1037 = vadd.f32 0.0, %v1036
        %1038 = vdwg.mxu0
        %1039 = vmatpush.bf16.msra.mxu0 0
        %1040 = vmatpush.bf16.msra.mxu0 0
        %1041 = vmatpush.bf16.msra.mxu0 0
        %1042 = vmatpush.bf16.msra.mxu0 0
        %1043 = vmatpush.bf16.msra.mxu0 0
        %1044 = vmatpush.bf16.msra.mxu0 0
        %1045 = vmatpush.bf16.msra.mxu0 0
        %1046 = vmatpush.bf16.msra.mxu0 %v1015
        %1047 = vmatmul.bf16.gmra.mxu0 %v1006
        %v1048 = vpop.f32.mrf.mxu0
        %v1049 = vadd.f32 0.0, %v1048
        %v1050 = vpop.f32.mrf.mxu0
        %v1051 = vadd.f32 0.0, %v1050
        %1052 = vmatmul.bf16.gmra.mxu0 %v1009
        %v1053 = vpop.f32.mrf.mxu0
        %v1054 = vadd.f32 0.0, %v1053
        %v1055 = vpop.f32.mrf.mxu0
        %v1056 = vadd.f32 0.0, %v1055
        %1057 = vdwg.mxu0
        %1058 = vmatpush.bf16.msra.mxu0 0
        %1059 = vmatpush.bf16.msra.mxu0 0
        %1060 = vmatpush.bf16.msra.mxu0 0
        %1061 = vmatpush.bf16.msra.mxu0 0
        %1062 = vmatpush.bf16.msra.mxu0 0
        %1063 = vmatpush.bf16.msra.mxu0 0
        %1064 = vmatpush.bf16.msra.mxu0 0
        %1065 = vmatpush.bf16.msra.mxu0 %v1018
        %1066 = vmatmul.bf16.gmra.mxu0 %v1006
        %v1067 = vpop.f32.mrf.mxu0
        %v1068 = vadd.f32 0.0, %v1067
        %v1069 = vpop.f32.mrf.mxu0
        %v1070 = vadd.f32 0.0, %v1069
        %1071 = vmatmul.bf16.gmra.mxu0 %v1009
        %v1072 = vpop.f32.mrf.mxu0
        %v1073 = vadd.f32 0.0, %v1072
        %v1074 = vpop.f32.mrf.mxu0
        %v1075 = vadd.f32 0.0, %v1074
        %1076 = vdwg.mxu0
        %v1077 = vadd.f32 %v960, %v1030
        %v1078 = vadd.f32 %v961, %v1049
        %v1079 = vadd.f32 %v962, %v1068
        %v1080 = vadd.f32 %v963, %v1032
        %v1081 = vadd.f32 %v964, %v1051
        %v1082 = vadd.f32 %v965, %v1070
        %v1083 = vadd.f32 %v966, %v1035
        %v1084 = vadd.f32 %v967, %v1054
        %v1085 = vadd.f32 %v968, %v1073
        %v1086 = vadd.f32 %v969, %v1037
        %v1087 = vadd.f32 %v970, %v1056
        %v1088 = vadd.f32 %v971, %v1075
        %v1089 = vld [vmem:[%s290] sm:$0x3f]
        %s1090 = scalar_lea.vmem %s1, 112
        %v1091 = vld [vmem:[%s1090] sm:$0xf]
        %v1092 = vld [vmem:[%s1090 + $0x4] sm:$0xf]
        %v1093 = vld [vmem:[%s1090 + $0x8] sm:$0xf]
        %v1094 = vld [vmem:[%s1090 + $0xc] sm:$0xf]
        %v1099 = vunpack.c.l.b16 %v1091
        %v1100 = vunpack.c.l.b16 %v1092
        %v1101 = vunpack.c.l.b16 %v1093
        %v1102 = vunpack.c.l.b16 %v1094
        %v1103 = vpack.c.b16 %v1100, %v1099
        %v1104 = vpack.c.b16 %v1102, %v1101
        %1106 = vst [vmem:[#allocation1] ss:$4 sm:$0xff] %v1089
        %v1107 = vld.sshfl [vmem:[#allocation1] sm:$0xff pattern:$0x73625140]
        %v1109 = vld.sshfl [vmem:[#allocation1 + $0x8] sm:$0xff pattern:$0x73625140]
        %v1111 = vld.sshfl [vmem:[#allocation1 + $0x10] sm:$0xff pattern:$0x73625140]
        %1113 = vrot.lane.b32.xlu0 %v1107, 91
        %v1114 = vpop.permute.xlu0 %1113
        %1115 = vrot.lane.b32.xlu0 %v1109, 91
        %v1116 = vpop.permute.xlu0 %1115
        %1117 = vrot.lane.b32.xlu0 %v1111, 91
        %v1118 = vpop.permute.xlu0 %1117
        %vm1119 = vcmask 744448
        %v1120 = vsel %vm1119, %v1114, %v1116
        %v1121 = vsel %vm1119, %v1116, %v1118
        %v1123 = vsel %vm347, %v1103, 0
        %v1126 = vsel %vm347, %v1104, 0
        %v1129 = vsel %vm354, %v1120, 0
        %v1132 = vsel %vm354, %v1121, 0
        %v1135 = vsel %vm354, %v1118, 0
        %1137 = vmatpush.bf16.msra.mxu0 0
        %1138 = vmatpush.bf16.msra.mxu0 0
        %1139 = vmatpush.bf16.msra.mxu0 0
        %1140 = vmatpush.bf16.msra.mxu0 0
        %1141 = vmatpush.bf16.msra.mxu0 0
        %1142 = vmatpush.bf16.msra.mxu0 0
        %1143 = vmatpush.bf16.msra.mxu0 0
        %1144 = vmatpush.bf16.msra.mxu0 %v1129
        %1145 = vmatmul.bf16.gmra.mxu0 %v1123
        %v1146 = vpop.f32.mrf.mxu0
        %v1147 = vadd.f32 0.0, %v1146
        %v1148 = vpop.f32.mrf.mxu0
        %v1149 = vadd.f32 0.0, %v1148
        %1150 = vmatmul.bf16.gmra.mxu0 %v1126
        %v1151 = vpop.f32.mrf.mxu0
        %v1152 = vadd.f32 0.0, %v1151
        %v1153 = vpop.f32.mrf.mxu0
        %v1154 = vadd.f32 0.0, %v1153
        %1155 = vdwg.mxu0
        %1156 = vmatpush.bf16.msra.mxu0 0
        %1157 = vmatpush.bf16.msra.mxu0 0
        %1158 = vmatpush.bf16.msra.mxu0 0
        %1159 = vmatpush.bf16.msra.mxu0 0
        %1160 = vmatpush.bf16.msra.mxu0 0
        %1161 = vmatpush.bf16.msra.mxu0 0
        %1162 = vmatpush.bf16.msra.mxu0 0
        %1163 = vmatpush.bf16.msra.mxu0 %v1132
        %1164 = vmatmul.bf16.gmra.mxu0 %v1123
        %v1165 = vpop.f32.mrf.mxu0
        %v1166 = vadd.f32 0.0, %v1165
        %v1167 = vpop.f32.mrf.mxu0
        %v1168 = vadd.f32 0.0, %v1167
        %1169 = vmatmul.bf16.gmra.mxu0 %v1126
        %v1170 = vpop.f32.mrf.mxu0
        %v1171 = vadd.f32 0.0, %v1170
        %v1172 = vpop.f32.mrf.mxu0
        %v1173 = vadd.f32 0.0, %v1172
        %1174 = vdwg.mxu0
        %1175 = vmatpush.bf16.msra.mxu0 0
        %1176 = vmatpush.bf16.msra.mxu0 0
        %1177 = vmatpush.bf16.msra.mxu0 0
        %1178 = vmatpush.bf16.msra.mxu0 0
        %1179 = vmatpush.bf16.msra.mxu0 0
        %1180 = vmatpush.bf16.msra.mxu0 0
        %1181 = vmatpush.bf16.msra.mxu0 0
        %1182 = vmatpush.bf16.msra.mxu0 %v1135
        %1183 = vmatmul.bf16.gmra.mxu0 %v1123
        %v1184 = vpop.f32.mrf.mxu0
        %v1185 = vadd.f32 0.0, %v1184
        %v1186 = vpop.f32.mrf.mxu0
        %v1187 = vadd.f32 0.0, %v1186
        %1188 = vmatmul.bf16.gmra.mxu0 %v1126
        %v1189 = vpop.f32.mrf.mxu0
        %v1190 = vadd.f32 0.0, %v1189
        %v1191 = vpop.f32.mrf.mxu0
        %v1192 = vadd.f32 0.0, %v1191
        %1193 = vdwg.mxu0
        %v1194 = vadd.f32 %v1077, %v1147
        %v1195 = vadd.f32 %v1078, %v1166
        %v1196 = vadd.f32 %v1079, %v1185
        %v1197 = vadd.f32 %v1080, %v1149
        %v1198 = vadd.f32 %v1081, %v1168
        %v1199 = vadd.f32 %v1082, %v1187
        %v1200 = vadd.f32 %v1083, %v1152
        %v1201 = vadd.f32 %v1084, %v1171
        %v1202 = vadd.f32 %v1085, %v1190
        %v1203 = vadd.f32 %v1086, %v1154
        %v1204 = vadd.f32 %v1087, %v1173
        %v1205 = vadd.f32 %v1088, %v1192
        %v1206 = vld [vmem:[%s290] sm:$0x3f]
        %s1207 = scalar_lea.vmem %s1, 128
        %v1208 = vld [vmem:[%s1207] sm:$0xf]
        %v1209 = vld [vmem:[%s1207 + $0x4] sm:$0xf]
        %v1210 = vld [vmem:[%s1207 + $0x8] sm:$0xf]
        %v1211 = vld [vmem:[%s1207 + $0xc] sm:$0xf]
        %v1216 = vunpack.c.l.b16 %v1208
        %v1217 = vunpack.c.l.b16 %v1209
        %v1218 = vunpack.c.l.b16 %v1210
        %v1219 = vunpack.c.l.b16 %v1211
        %v1220 = vpack.c.b16 %v1217, %v1216
        %v1221 = vpack.c.b16 %v1219, %v1218
        %1223 = vst [vmem:[#allocation1] ss:$4 sm:$0xff] %v1206
        %v1224 = vld.sshfl [vmem:[#allocation1] sm:$0xff pattern:$0x73625140]
        %v1226 = vld.sshfl [vmem:[#allocation1 + $0x8] sm:$0xff pattern:$0x73625140]
        %v1228 = vld.sshfl [vmem:[#allocation1 + $0x10] sm:$0xff pattern:$0x73625140]
        %1230 = vrot.lane.b32.xlu0 %v1224, 90
        %v1231 = vpop.permute.xlu0 %1230
        %1232 = vrot.lane.b32.xlu0 %v1226, 90
        %v1233 = vpop.permute.xlu0 %1232
        %1234 = vrot.lane.b32.xlu0 %v1228, 90
        %v1235 = vpop.permute.xlu0 %1234
        %vm1236 = vcmask 736256
        %v1237 = vsel %vm1236, %v1231, %v1233
        %v1238 = vsel %vm1236, %v1233, %v1235
        %v1240 = vsel %vm347, %v1220, 0
        %v1243 = vsel %vm347, %v1221, 0
        %v1246 = vsel %vm354, %v1237, 0
        %v1249 = vsel %vm354, %v1238, 0
        %v1252 = vsel %vm354, %v1235, 0
        %1254 = vmatpush.bf16.msra.mxu0 0
        %1255 = vmatpush.bf16.msra.mxu0 0
        %1256 = vmatpush.bf16.msra.mxu0 0
        %1257 = vmatpush.bf16.msra.mxu0 0
        %1258 = vmatpush.bf16.msra.mxu0 0
        %1259 = vmatpush.bf16.msra.mxu0 0
        %1260 = vmatpush.bf16.msra.mxu0 0
        %1261 = vmatpush.bf16.msra.mxu0 %v1246
        %1262 = vmatmul.bf16.gmra.mxu0 %v1240
        %v1263 = vpop.f32.mrf.mxu0
        %v1264 = vadd.f32 0.0, %v1263
        %v1265 = vpop.f32.mrf.mxu0
        %v1266 = vadd.f32 0.0, %v1265
        %1267 = vmatmul.bf16.gmra.mxu0 %v1243
        %v1268 = vpop.f32.mrf.mxu0
        %v1269 = vadd.f32 0.0, %v1268
        %v1270 = vpop.f32.mrf.mxu0
        %v1271 = vadd.f32 0.0, %v1270
        %1272 = vdwg.mxu0
        %1273 = vmatpush.bf16.msra.mxu0 0
        %1274 = vmatpush.bf16.msra.mxu0 0
        %1275 = vmatpush.bf16.msra.mxu0 0
        %1276 = vmatpush.bf16.msra.mxu0 0
        %1277 = vmatpush.bf16.msra.mxu0 0
        %1278 = vmatpush.bf16.msra.mxu0 0
        %1279 = vmatpush.bf16.msra.mxu0 0
        %1280 = vmatpush.bf16.msra.mxu0 %v1249
        %1281 = vmatmul.bf16.gmra.mxu0 %v1240
        %v1282 = vpop.f32.mrf.mxu0
        %v1283 = vadd.f32 0.0, %v1282
        %v1284 = vpop.f32.mrf.mxu0
        %v1285 = vadd.f32 0.0, %v1284
        %1286 = vmatmul.bf16.gmra.mxu0 %v1243
        %v1287 = vpop.f32.mrf.mxu0
        %v1288 = vadd.f32 0.0, %v1287
        %v1289 = vpop.f32.mrf.mxu0
        %v1290 = vadd.f32 0.0, %v1289
        %1291 = vdwg.mxu0
        %1292 = vmatpush.bf16.msra.mxu0 0
        %1293 = vmatpush.bf16.msra.mxu0 0
        %1294 = vmatpush.bf16.msra.mxu0 0
        %1295 = vmatpush.bf16.msra.mxu0 0
        %1296 = vmatpush.bf16.msra.mxu0 0
        %1297 = vmatpush.bf16.msra.mxu0 0
        %1298 = vmatpush.bf16.msra.mxu0 0
        %1299 = vmatpush.bf16.msra.mxu0 %v1252
        %1300 = vmatmul.bf16.gmra.mxu0 %v1240
        %v1301 = vpop.f32.mrf.mxu0
        %v1302 = vadd.f32 0.0, %v1301
        %v1303 = vpop.f32.mrf.mxu0
        %v1304 = vadd.f32 0.0, %v1303
        %1305 = vmatmul.bf16.gmra.mxu0 %v1243
        %v1306 = vpop.f32.mrf.mxu0
        %v1307 = vadd.f32 0.0, %v1306
        %v1308 = vpop.f32.mrf.mxu0
        %v1309 = vadd.f32 0.0, %v1308
        %1310 = vdwg.mxu0
        %v1311 = vadd.f32 %v1194, %v1264
        %v1312 = vadd.f32 %v1195, %v1283
        %v1313 = vadd.f32 %v1196, %v1302
        %v1314 = vadd.f32 %v1197, %v1266
        %v1315 = vadd.f32 %v1198, %v1285
        %v1316 = vadd.f32 %v1199, %v1304
        %v1317 = vadd.f32 %v1200, %v1269
        %v1318 = vadd.f32 %v1201, %v1288
        %v1319 = vadd.f32 %v1202, %v1307
        %v1320 = vadd.f32 %v1203, %v1271
        %v1321 = vadd.f32 %v1204, %v1290
        %v1322 = vadd.f32 %v1205, %v1309
        %v1323 = vld [vmem:[%s2] sm:$0xff]
        %v1324 = vld [vmem:[%s2 + $0x8] sm:$0xff]
        %v1325 = vld [vmem:[%s2 + $0x10] sm:$0xff]
        %v1326 = vld [vmem:[%s2 + $0x18] sm:$0xff]
        %1328 = vset.pattern.permute.xlu0 0
        %1329 = vperm.xlu0 %1328, %v1323
        %v1330 = vpop.permute.xlu0 %1329
        %1333 = vset.pattern.permute.xlu0 0
        %1334 = vperm.xlu0 %1333, %v1324
        %v1335 = vpop.permute.xlu0 %1334
        %1338 = vset.pattern.permute.xlu0 0
        %1339 = vperm.xlu0 %1338, %v1325
        %v1340 = vpop.permute.xlu0 %1339
        %1343 = vset.pattern.permute.xlu0 0
        %1344 = vperm.xlu0 %1343, %v1326
        %v1345 = vpop.permute.xlu0 %1344
        %v1347 = vadd.f32 %v1311, %v1330
        %v1348 = vadd.f32 %v1312, %v1330
        %v1349 = vadd.f32 %v1313, %v1330
        %v1350 = vadd.f32 %v1314, %v1335
        %v1351 = vadd.f32 %v1315, %v1335
        %v1352 = vadd.f32 %v1316, %v1335
        %v1353 = vadd.f32 %v1317, %v1340
        %v1354 = vadd.f32 %v1318, %v1340
        %v1355 = vadd.f32 %v1319, %v1340
        %v1356 = vadd.f32 %v1320, %v1345
        %v1357 = vadd.f32 %v1321, %v1345
        %v1358 = vadd.f32 %v1322, %v1345
        %v1359 = vmax.f32 %v1347, 0.0
        %v1360 = vmax.f32 %v1348, 0.0
        %v1361 = vmax.f32 %v1349, 0.0
        %v1362 = vmax.f32 %v1350, 0.0
        %v1363 = vmax.f32 %v1351, 0.0
        %v1364 = vmax.f32 %v1352, 0.0
        %v1365 = vmax.f32 %v1353, 0.0
        %v1366 = vmax.f32 %v1354, 0.0
        %v1367 = vmax.f32 %v1355, 0.0
        %v1368 = vmax.f32 %v1356, 0.0
        %v1369 = vmax.f32 %v1357, 0.0
        %v1370 = vmax.f32 %v1358, 0.0
        %v1371 = vld [vmem:[%s3] sm:$0xff]
        %v1372 = vld [vmem:[%s3 + $0x8] sm:$0xff]
        %v1373 = vld [vmem:[%s3 + $0x10] sm:$0xff]
        %v1374 = vld [vmem:[%s3 + $0x18] sm:$0xff]
        %1376 = vset.pattern.permute.xlu0 0
        %1377 = vperm.xlu0 %1376, %v1371
        %v1378 = vpop.permute.xlu0 %1377
        %1381 = vset.pattern.permute.xlu0 0
        %1382 = vperm.xlu0 %1381, %v1372
        %v1383 = vpop.permute.xlu0 %1382
        %1386 = vset.pattern.permute.xlu0 0
        %1387 = vperm.xlu0 %1386, %v1373
        %v1388 = vpop.permute.xlu0 %1387
        %1391 = vset.pattern.permute.xlu0 0
        %1392 = vperm.xlu0 %1391, %v1374
        %v1393 = vpop.permute.xlu0 %1392
        %v1395 = vmul.f32 %v1359, %v1378
        %v1396 = vmul.f32 %v1360, %v1378
        %v1397 = vmul.f32 %v1361, %v1378
        %v1398 = vmul.f32 %v1362, %v1383
        %v1399 = vmul.f32 %v1363, %v1383
        %v1400 = vmul.f32 %v1364, %v1383
        %v1401 = vmul.f32 %v1365, %v1388
        %v1402 = vmul.f32 %v1366, %v1388
        %v1403 = vmul.f32 %v1367, %v1388
        %v1404 = vmul.f32 %v1368, %v1393
        %v1405 = vmul.f32 %v1369, %v1393
        %v1406 = vmul.f32 %v1370, %v1393
        %v1407 = vadd.f32 %v1395, %v1398
        %v1408 = vadd.f32 %v1407, %v1401
        %v1409 = vadd.f32 %v1408, %v1404
        %v1410 = vrot.slane %v1409, 4
        %v1411 = vadd.f32 %v1409, %v1410
        %v1412 = vrot.slane %v1411, 2
        %v1413 = vadd.f32 %v1411, %v1412
        %v1414 = vrot.slane %v1413, 1
        %v1415 = vadd.f32 %v1413, %v1414
        %v1416 = vadd.f32 %v1396, %v1399
        %v1417 = vadd.f32 %v1416, %v1402
        %v1418 = vadd.f32 %v1417, %v1405
        %v1419 = vrot.slane %v1418, 4
        %v1420 = vadd.f32 %v1418, %v1419
        %v1421 = vrot.slane %v1420, 2
        %v1422 = vadd.f32 %v1420, %v1421
        %v1423 = vrot.slane %v1422, 1
        %v1424 = vadd.f32 %v1422, %v1423
        %vm1425 = vcmask 261120
        %v1426 = vsel %vm1425, %v1397, 0.0
        %v1427 = vsel %vm1425, %v1400, 0.0
        %v1428 = vadd.f32 %v1426, %v1427
        %v1429 = vsel %vm1425, %v1403, 0.0
        %v1430 = vadd.f32 %v1428, %v1429
        %v1431 = vsel %vm1425, %v1406, 0.0
        %v1432 = vadd.f32 %v1430, %v1431
        %v1433 = vrot.slane %v1432, 4
        %v1434 = vadd.f32 %v1432, %v1433
        %v1435 = vrot.slane %v1434, 2
        %v1436 = vadd.f32 %v1434, %v1435
        %v1437 = vrot.slane %v1436, 1
        %v1438 = vadd.f32 %v1436, %v1437
        %s1439 = sld [smem:[#allocation2]]
        %v1440 = vstv %s1439
        %v1441 = vadd.f32 %v1415, %v1440
        %v1442 = vadd.f32 %v1424, %v1440
        %v1443 = vadd.f32 %v1438, %v1440
        %1444 = vset.pattern.permute.xlu0 1
        %1445 = vperm.xlu0 %1444, %v1371
        %v1446 = vpop.permute.xlu0 %1445
        %1448 = vset.pattern.permute.xlu0 1
        %1449 = vperm.xlu0 %1448, %v1372
        %v1450 = vpop.permute.xlu0 %1449
        %1452 = vset.pattern.permute.xlu0 1
        %1453 = vperm.xlu0 %1452, %v1373
        %v1454 = vpop.permute.xlu0 %1453
        %1456 = vset.pattern.permute.xlu0 1
        %1457 = vperm.xlu0 %1456, %v1374
        %v1458 = vpop.permute.xlu0 %1457
        %v1460 = vmul.f32 %v1359, %v1446
        %v1461 = vmul.f32 %v1360, %v1446
        %v1462 = vmul.f32 %v1361, %v1446
        %v1463 = vmul.f32 %v1362, %v1450
        %v1464 = vmul.f32 %v1363, %v1450
        %v1465 = vmul.f32 %v1364, %v1450
        %v1466 = vmul.f32 %v1365, %v1454
        %v1467 = vmul.f32 %v1366, %v1454
        %v1468 = vmul.f32 %v1367, %v1454
        %v1469 = vmul.f32 %v1368, %v1458
        %v1470 = vmul.f32 %v1369, %v1458
        %v1471 = vmul.f32 %v1370, %v1458
        %v1472 = vadd.f32 %v1460, %v1463
        %v1473 = vadd.f32 %v1472, %v1466
        %v1474 = vadd.f32 %v1473, %v1469
        %v1475 = vrot.slane %v1474, 4
        %v1476 = vadd.f32 %v1474, %v1475
        %v1477 = vrot.slane %v1476, 2
        %v1478 = vadd.f32 %v1476, %v1477
        %v1479 = vrot.slane %v1478, 1
        %v1480 = vadd.f32 %v1478, %v1479
        %v1481 = vadd.f32 %v1461, %v1464
        %v1482 = vadd.f32 %v1481, %v1467
        %v1483 = vadd.f32 %v1482, %v1470
        %v1484 = vrot.slane %v1483, 4
        %v1485 = vadd.f32 %v1483, %v1484
        %v1486 = vrot.slane %v1485, 2
        %v1487 = vadd.f32 %v1485, %v1486
        %v1488 = vrot.slane %v1487, 1
        %v1489 = vadd.f32 %v1487, %v1488
        %v1490 = vsel %vm1425, %v1462, 0.0
        %v1491 = vsel %vm1425, %v1465, 0.0
        %v1492 = vadd.f32 %v1490, %v1491
        %v1493 = vsel %vm1425, %v1468, 0.0
        %v1494 = vadd.f32 %v1492, %v1493
        %v1495 = vsel %vm1425, %v1471, 0.0
        %v1496 = vadd.f32 %v1494, %v1495
        %v1497 = vrot.slane %v1496, 4
        %v1498 = vadd.f32 %v1496, %v1497
        %v1499 = vrot.slane %v1498, 2
        %v1500 = vadd.f32 %v1498, %v1499
        %v1501 = vrot.slane %v1500, 1
        %v1502 = vadd.f32 %v1500, %v1501
        %s1503 = sld [smem:[#allocation2 + $0x1]]
        %v1504 = vstv %s1503
        %v1505 = vadd.f32 %v1480, %v1504
        %v1506 = vadd.f32 %v1489, %v1504
        %v1507 = vadd.f32 %v1502, %v1504
        %v1508 = vxor.u32 %v1441, 2147483648
        %v1509 = vxor.u32 %v1442, 2147483648
        %v1510 = vxor.u32 %v1443, 2147483648
        %v1511 = vmul.f32 %v1508, 1.442695
        %v1512 = vpow.pop %v1511
        %v1513 = vmul.f32 %v1509, 1.442695
        %v1514 = vpow.pop %v1513
        %v1515 = vmul.f32 %v1510, 1.442695
        %v1516 = vpow.pop %v1515
        %v1517 = vadd.f32 %v1512, 1.0
        %v1518 = vadd.f32 %v1514, 1.0
        %v1519 = vadd.f32 %v1516, 1.0
        %v1520 = vrcp.pop %v1517
        %v1521 = vmul.f32 %v1517, %v1520
        %v1522 = vsub.f32 1.0, %v1521
        %v1523 = vmul.f32 %v1520, %v1522
        %v1524 = vadd.f32 %v1520, %v1523
        %vm1525 = vweird.f32 %v1517
        %vm1526 = vweird.f32 %v1520
        %vm1527 = vmor %vm1525, %vm1526
        %v1528 = vsel %vm1527, %v1520, %v1524
        %v1529 = vand.u32 2147483647, %v1517
        %vm1530 = vcmp.eq.f32.partialorder %v1529, 8.507059e+37
        %v1531 = vand.u32 %v1517, 2147483648
        %v1532 = vor.u32 1.1754944e-38, %v1531
        %v1533 = vsel %vm1530, %v1532, %v1528
        %v1534 = vmul.f32 1.0, %v1533
        %v1535 = vrcp.pop %v1518
        %v1536 = vmul.f32 %v1518, %v1535
        %v1537 = vsub.f32 1.0, %v1536
        %v1538 = vmul.f32 %v1535, %v1537
        %v1539 = vadd.f32 %v1535, %v1538
        %vm1540 = vweird.f32 %v1518
        %vm1541 = vweird.f32 %v1535
        %vm1542 = vmor %vm1540, %vm1541
        %v1543 = vsel %vm1542, %v1535, %v1539
        %v1544 = vand.u32 2147483647, %v1518
        %vm1545 = vcmp.eq.f32.partialorder %v1544, 8.507059e+37
        %v1546 = vand.u32 %v1518, 2147483648
        %v1547 = vor.u32 1.1754944e-38, %v1546
        %v1548 = vsel %vm1545, %v1547, %v1543
        %v1549 = vmul.f32 1.0, %v1548
        %v1550 = vrcp.pop %v1519
        %v1551 = vmul.f32 %v1519, %v1550
        %v1552 = vsub.f32 1.0, %v1551
        %v1553 = vmul.f32 %v1550, %v1552
        %v1554 = vadd.f32 %v1550, %v1553
        %vm1555 = vweird.f32 %v1519
        %vm1556 = vweird.f32 %v1550
        %vm1557 = vmor %vm1555, %vm1556
        %v1558 = vsel %vm1557, %v1550, %v1554
        %v1559 = vand.u32 2147483647, %v1519
        %vm1560 = vcmp.eq.f32.partialorder %v1559, 8.507059e+37
        %v1561 = vand.u32 %v1519, 2147483648
        %v1562 = vor.u32 1.1754944e-38, %v1561
        %v1563 = vsel %vm1560, %v1562, %v1558
        %v1564 = vmul.f32 1.0, %v1563
        %v1568 = vrot.slane %v1549, 7
        %v1569 = vrot.slane %v1564, 6
        %vm1570 = vcmask 1040384
        %v1571 = vsel %vm1570, %v1534, %v1568
        %v1572 = vsel %vm354, %v1571, %v1569
        %v1574 = vlaneseq
        %vm1575 = vcmp.ge.s32.totalorder %v1574, 0
        %vm1576 = vcmp.lt.s32.totalorder %v1574, 288
        %vm1577 = vmand %vm1575, %vm1576
        %1578 = vst.msk [vmem:[%s298] sm:$0x7] %vm1577, %v1572
        %v1579 = vmax.f32 %v1505, 0.0
        %v1580 = vmax.f32 %v1506, 0.0
        %v1581 = vmax.f32 %v1507, 0.0
        %v1582 = vadd.f32 %v1579, 1e-10
        %v1583 = vadd.f32 %v1580, 1e-10
        %v1584 = vadd.f32 %v1581, 1e-10
        %v1585 = vlog2.pop %v1582
        %v1586 = vmul.f32 %v1585, 0.6931472
        %v1587 = vlog2.pop %v1583
        %v1588 = vmul.f32 %v1587, 0.6931472
        %v1589 = vlog2.pop %v1584
        %v1590 = vmul.f32 %v1589, 0.6931472
        %v1594 = vrot.slane %v1588, 7
        %v1595 = vrot.slane %v1590, 6
        %v1596 = vsel %vm1570, %v1586, %v1594
        %v1597 = vsel %vm354, %v1596, %v1595
        %1599 = vst.msk [vmem:[%s307] sm:$0x7] %vm1577, %v1597
        %s1600 = smul.u32 3, %s24
        %p1601 = scmp.lt.s32.totalorder %s23, 1
        %s1602 = scalar_select %p1601, %s23, 1
        %p1603 = scmp.lt.s32.totalorder %s1600, 2
        %s1604 = scalar_select %p1603, %s1600, 2
        %s1605 = smul.addr %s1602, 3
        %s1606 = sadd.s32 %s1604, %s1605
        %s1607 = scalar_lea.vmem %s5, %s1606
        %s1608 = smul.u32 3, %s24
        %p1609 = scmp.lt.s32.totalorder %s23, 1
        %s1610 = scalar_select %p1609, %s23, 1
        %p1611 = scmp.lt.s32.totalorder %s1608, 2
        %s1612 = scalar_select %p1611, %s1608, 2
        %s1613 = smul.addr %s1610, 3
        %s1614 = sadd.s32 %s1612, %s1613
        %s1615 = scalar_lea.vmem %s6, %s1614
        // Predicated region
        $region45: #{detection_forward.1} parent=39 // pred_check
          %p1616 = pneg %p161
        $region46: #{detection_forward.1} parent=39 // pred_check_branch
          %1618 = sbr.rel (%p1616) target = $region48
        $region47: #{detection_forward.1} parent=39 // pred_region
          %s1619 = smul.u32 3, %s24
        $region48: #{detection_forward.1} parent=39 // pred_fallthru
          _
        // Predicated region
        $region49: #{detection_forward.1} parent=39 // pred_check
          %p1620 = pneg %p189
        $region50: #{detection_forward.1} parent=39 // pred_check_branch
          %1622 = sbr.rel (%p1620) target = $region52
        $region51: #{detection_forward.1} parent=39 // pred_region
          %s1623 = smul.u32 3, %s24
        $region52: #{detection_forward.1} parent=39 // pred_fallthru
          _
      $region40: #{detection_forward.1} parent=5 // pred_fallthru
        _
      %p1624 = scmp.le.s32.totalorder 2, %s14
      // Predicated region
      $region53: #{detection_forward.1} parent=5 // pred_check
        %p1625 = pneg %p1624
      $region54: #{detection_forward.1} parent=5 // pred_check_branch
        %1627 = sbr.rel (%p1625) target = $region56
      $region55: #{detection_forward.1} parent=5 // pred_region
        %s1628 = ssub.s32 %s14, 2
        // Predicated region
        $region57: #{detection_forward.1} parent=55 // pred_check
          %p1629 = pneg %p167
        $region58: #{detection_forward.1} parent=55 // pred_check_branch
          %1631 = sbr.rel (%p1629) target = $region60
        $region59: #{detection_forward.1} parent=55 // pred_region
          %s1632 = smul.u32 3, %s26
          %p1633 = scmp.lt.s32.totalorder %s25, 1
          %s1634 = scalar_select %p1633, %s25, 1
          %p1635 = scmp.lt.s32.totalorder %s1632, 2
          %s1636 = scalar_select %p1635, %s1632, 2
          %s1637 = smul.addr %s1634, 3
          %s1638 = sadd.s32 %s1636, %s1637
          %s1639 = scalar_lea.vmem %s5, %s1638
        $region60: #{detection_forward.1} parent=55 // pred_fallthru
          _
        // Predicated region
        $region61: #{detection_forward.1} parent=55 // pred_check
          %p1640 = pneg %p195
        $region62: #{detection_forward.1} parent=55 // pred_check_branch
          %1642 = sbr.rel (%p1640) target = $region64
        $region63: #{detection_forward.1} parent=55 // pred_region
          %s1643 = smul.u32 3, %s26
          %p1644 = scmp.lt.s32.totalorder %s25, 1
          %s1645 = scalar_select %p1644, %s25, 1
          %p1646 = scmp.lt.s32.totalorder %s1643, 2
          %s1647 = scalar_select %p1646, %s1643, 2
          %s1648 = smul.addr %s1645, 3
          %s1649 = sadd.s32 %s1647, %s1648
          %s1650 = scalar_lea.vmem %s6, %s1649
        $region64: #{detection_forward.1} parent=55 // pred_fallthru
          _
      $region56: #{detection_forward.1} parent=5 // pred_fallthru
        _
    $region6: #{detection_forward.1} parent=1 // loop_footer
      %s18 = sadd.s32 1, %s14
    $region7: #{detection_forward.1} parent=1 // loop_footer_branch
      %13 = sbr.rel target = $region3
    $region8: #{detection_forward.1} parent=1 // loop_exit
      _
    %1651 = vsyncpa [#allocation3], 1
    %s1652 = scalar_lea.sflag [#allocation3], 1
    %1653 = vsyncpa %s1652, 1

</llo_original>
